<compile_context>
chip_gen: v7x
topology: tpu7x:2x2x1
jax: 0.10.0
libtpu: 0.0.40
codegen_flags: <defaults>
</compile_context>

<pallas_src>
import functools

import jax
import jax.numpy as jnp
from jax import lax
from jax.experimental import pallas as pl
from jax.experimental.pallas import tpu as pltpu

EPS = 1e-5

# Explicit scoped-VMEM limit (== the usual default).  Keeps the banded-weight
# footprint honest on v7x (64 MiB physical VMEM); at real ResNet widths the
# Wout*Cout output-column axis must additionally be tiled as a grid dimension.
_VMEM_LIMIT_BYTES = 32 * 1024 * 1024


def _pick_batch_tile(n, rows_per_image, target_rows=256, max_tile=8):
    """Largest divisor of n (<= max_tile) keeping B_tile*H near target_rows.

    Batching images per grid step fattens the MXU M dimension and amortizes
    the per-step pipeline overhead (the grid shrinks by the same factor)."""
    bt = 1
    for d in range(1, n + 1):
        if n % d == 0 and d <= max_tile and d * rows_per_image <= target_rows:
            bt = d
    return bt


# ---------------- pass 1: per-channel batch statistics of x --------------------
def _bn_stats_kernel(x_ref, pool_ref, sum_ref, sq_ref):
    @pl.when(pl.program_id(0) == 0)
    def _():
        sum_ref[...] = jnp.zeros_like(sum_ref)
        sq_ref[...] = jnp.zeros_like(sq_ref)

    # Lane-dense (rows, W*C) tile: the axis-0 sums stay on the VPU; the
    # per-channel pooling over W is a tiny MXU matmul instead of a
    # cross-sublane XLU reduction over a (H, W, C) block.
    x = x_ref[...].astype(jnp.float32)
    col_sum = jnp.sum(x, axis=0, keepdims=True)
    col_sq = jnp.sum(x * x, axis=0, keepdims=True)
    sum_ref[...] += jnp.dot(col_sum, pool_ref[...],
                            preferred_element_type=jnp.float32)
    sq_ref[...] += jnp.dot(col_sq, pool_ref[...],
                           preferred_element_type=jnp.float32)


def bn_batch_stats(x2d, pool, rows_per_step):
    """x2d: (N*H, W*C) lane-dense rows; pool: (W*C, C) channel-pool matrix.
    Returns per-channel (sum, sum_sq) as (C,) f32 arrays."""
    rows, wc = x2d.shape
    c = pool.shape[1]
    s, sq = pl.pallas_call(
        _bn_stats_kernel,
        out_shape=[jax.ShapeDtypeStruct((1, c), jnp.float32),
                   jax.ShapeDtypeStruct((1, c), jnp.float32)],
        grid_spec=pltpu.PrefetchScalarGridSpec(
            num_scalar_prefetch=0, grid=(rows // rows_per_step,),
            in_specs=[pl.BlockSpec((rows_per_step, wc), lambda n: (n, 0)),
                      pl.BlockSpec((wc, c), lambda n: (0, 0))],
            out_specs=[pl.BlockSpec((1, c), lambda n: (0, 0)),
                       pl.BlockSpec((1, c), lambda n: (0, 0))]),
        # The sum / sum-sq outputs accumulate across the grid.
        compiler_params=pltpu.CompilerParams(
            dimension_semantics=("arbitrary",),
            vmem_limit_bytes=_VMEM_LIMIT_BYTES),
    )(x2d, pool)
    return s[0], sq[0]


# ---------------- pass 2: relu(bn1) + conv1 (+ 1x1 shortcut) + bn2 sums --------
def _conv1_fused_kernel(*refs, bt, h, hout, stride, has_shortcut):
    if has_shortcut:
        (x_ref, s_ref, b_ref, w_ref, pool_ref, wsc_ref,
         h_ref, sum_ref, sq_ref, sc_ref, xpad_ref) = refs
    else:
        (x_ref, s_ref, b_ref, w_ref, pool_ref,
         h_ref, sum_ref, sq_ref, xpad_ref) = refs

    blk = h + 2                       # per-image rows in the padded scratch
    big = bt * blk
    nout = w_ref.shape[2]
    wc = xpad_ref.shape[1]

    @pl.when(pl.program_id(0) == 0)
    def _():
        sum_ref[...] = jnp.zeros_like(sum_ref)
        sq_ref[...] = jnp.zeros_like(sq_ref)

    # Only the 2*bt per-image padding rows get (re-)zeroed; interior rows are
    # fully overwritten below (no full-scratch zeroing per step).
    zrow = jnp.zeros((1, wc), jnp.float32)
    for b in range(bt):
        xpad_ref[pl.ds(b * blk, 1), :] = zrow
        xpad_ref[pl.ds(b * blk + h + 1, 1), :] = zrow

    # Fused bn1 affine + ReLU for all bt images at once: (bt*H, W*Cin).
    a = jnp.maximum(x_ref[...].astype(jnp.float32) * s_ref[...] + b_ref[...], 0.0)

    # Interior rows of the padded scratch (one contiguous store per image).
    for b in range(bt):
        xpad_ref[pl.ds(b * blk + 1, h), :] = a[b * h:(b + 1) * h, :]

    w0, w1, w2 = w_ref[0], w_ref[1], w_ref[2]
    row_sum = jnp.zeros((1, nout), jnp.float32)
    row_sq = jnp.zeros((1, nout), jnp.float32)
    # TODO(synk): cast matmul operands to bf16 (and store h/sc in bf16) at real
    # ResNet channel counts; kept fp32 here so the tightened self-test holds.

    if stride == 1:
        # Centre tap straight from the activation already in vregs (aligned
        # with the output rows); +/-1 shifted taps via the zero-padded scratch
        # as two fat (bt*(H+2)-2)-row matmuls.
        center = jnp.dot(a, w1, preferred_element_type=jnp.float32)
        shift = (jnp.dot(xpad_ref[pl.ds(0, big - 2), :], w0,
                         preferred_element_type=jnp.float32)
                 + jnp.dot(xpad_ref[pl.ds(2, big - 2), :], w2,
                           preferred_element_type=jnp.float32))
        if has_shortcut:
            sc_ref[...] = jnp.dot(a, wsc_ref[...],
                                  preferred_element_type=jnp.float32
                                  ).astype(sc_ref.dtype)
        for b in range(bt):
            rows_b = (center[b * h:(b + 1) * h, :]
                      + shift[b * blk:b * blk + h, :])
            row_sum += jnp.sum(rows_b, axis=0, keepdims=True)
            row_sq += jnp.sum(rows_b * rows_b, axis=0, keepdims=True)
            h_ref[pl.ds(b * hout, hout), :] = rows_b.astype(h_ref.dtype)
    else:
        # Strided path (not exercised by the self-test): per-image strided
        # sublane reads from the padded scratch.
        # TODO(synk): split even/odd rows so stride-2 operands are contiguous.
        for b in range(bt):
            base = b * blk
            rows_b = jnp.dot(xpad_ref[pl.ds(base + 0, hout, stride), :], w0,
                             preferred_element_type=jnp.float32)
            rows_b += jnp.dot(xpad_ref[pl.ds(base + 1, hout, stride), :], w1,
                              preferred_element_type=jnp.float32)
            rows_b += jnp.dot(xpad_ref[pl.ds(base + 2, hout, stride), :], w2,
                              preferred_element_type=jnp.float32)
            if has_shortcut:
                sc_ref[pl.ds(b * hout, hout), :] = jnp.dot(
                    xpad_ref[pl.ds(base + 1, hout, stride), :], wsc_ref[...],
                    preferred_element_type=jnp.float32).astype(sc_ref.dtype)
            row_sum += jnp.sum(rows_b, axis=0, keepdims=True)
            row_sq += jnp.sum(rows_b * rows_b, axis=0, keepdims=True)
            h_ref[pl.ds(b * hout, hout), :] = rows_b.astype(h_ref.dtype)

    # Fused bn2 batch statistics, pooled out of the lane-flattened layout.
    sum_ref[...] += jnp.dot(row_sum, pool_ref[...],
                            preferred_element_type=jnp.float32)
    sq_ref[...] += jnp.dot(row_sq, pool_ref[...],
                           preferred_element_type=jnp.float32)


def conv1_fused(x2d, s_row, b_row, w_band, pool, wsc_band, *,
                bt, h, hout, wout, cout, stride):
    rows, wc = x2d.shape
    n_img = rows // h
    nsteps = n_img // bt
    nout = wout * cout
    has_shortcut = wsc_band is not None
    kern = functools.partial(_conv1_fused_kernel, bt=bt, h=h, hout=hout,
                             stride=stride, has_shortcut=has_shortcut)
    in_specs = [
        pl.BlockSpec((bt * h, wc), lambda n: (n, 0)),
        pl.BlockSpec((1, wc), lambda n: (0, 0)),
        pl.BlockSpec((1, wc), lambda n: (0, 0)),
        pl.BlockSpec((3, wc, nout), lambda n: (0, 0, 0)),
        pl.BlockSpec((nout, cout), lambda n: (0, 0)),
    ]
    args = [x2d, s_row, b_row, w_band, pool]
    out_shapes = [
        jax.ShapeDtypeStruct((n_img * hout, nout), x2d.dtype),   # h (lane-dense)
        jax.ShapeDtypeStruct((1, cout), jnp.float32),            # sum(h)
        jax.ShapeDtypeStruct((1, cout), jnp.float32),            # sum(h^2)
    ]
    out_specs = [
        pl.BlockSpec((bt * hout, nout), lambda n: (n, 0)),
        pl.BlockSpec((1, cout), lambda n: (0, 0)),
        pl.BlockSpec((1, cout), lambda n: (0, 0)),
    ]
    if has_shortcut:
        in_specs.append(pl.BlockSpec((wc, nout), lambda n: (0, 0)))
        args.append(wsc_band)
        out_shapes.append(jax.ShapeDtypeStruct((n_img * hout, nout), x2d.dtype))
        out_specs.append(pl.BlockSpec((bt * hout, nout), lambda n: (n, 0)))
    outs = pl.pallas_call(
        kern,
        out_shape=out_shapes,
        grid_spec=pltpu.PrefetchScalarGridSpec(
            num_scalar_prefetch=0, grid=(nsteps,),
            in_specs=in_specs, out_specs=out_specs,
            scratch_shapes=[pltpu.VMEM((bt * (h + 2), wc), jnp.float32)]),
        # "arbitrary": the bn2 sum / sum-sq outputs accumulate across the grid.
        compiler_params=pltpu.CompilerParams(
            dimension_semantics=("arbitrary",),
            vmem_limit_bytes=_VMEM_LIMIT_BYTES),
    )(*args)
    if has_shortcut:
        h_out, h_sum, h_sq, sc = outs
    else:
        h_out, h_sum, h_sq = outs
        sc = None
    return h_out, sc, h_sum[0], h_sq[0]


# ---------------- pass 3: relu(bn2) + conv2 + residual add ---------------------
def _conv2_fused_kernel(h_ref, s_ref, b_ref, w_ref, res_ref, o_ref, hpad_ref,
                        *, bt, hout):
    blk = hout + 2
    big = bt * blk
    wc = hpad_ref.shape[1]

    # Re-zero only the 2*bt padding rows (interior rows overwritten below).
    zrow = jnp.zeros((1, wc), jnp.float32)
    for b in range(bt):
        hpad_ref[pl.ds(b * blk, 1), :] = zrow
        hpad_ref[pl.ds(b * blk + hout + 1, 1), :] = zrow

    # Fused bn2 affine + ReLU for all bt images at once.
    a = jnp.maximum(h_ref[...].astype(jnp.float32) * s_ref[...] + b_ref[...], 0.0)
    for b in range(bt):
        hpad_ref[pl.ds(b * blk + 1, hout), :] = a[b * hout:(b + 1) * hout, :]

    w0, w1, w2 = w_ref[0], w_ref[1], w_ref[2]
    # Centre tap from vregs + fused residual add (both aligned with out rows).
    base = (jnp.dot(a, w1, preferred_element_type=jnp.float32)
            + res_ref[...].astype(jnp.float32))
    shift = (jnp.dot(hpad_ref[pl.ds(0, big - 2), :], w0,
                     preferred_element_type=jnp.float32)
             + jnp.dot(hpad_ref[pl.ds(2, big - 2), :], w2,
                       preferred_element_type=jnp.float32))
    for b in range(bt):
        o_ref[pl.ds(b * hout, hout), :] = (
            base[b * hout:(b + 1) * hout, :]
            + shift[b * blk:b * blk + hout, :]).astype(o_ref.dtype)


def conv2_fused(h2d, s_row, b_row, w_band, res2d, *, bt, hout):
    rows, wc_mid = h2d.shape
    nout = w_band.shape[2]
    nsteps = (rows // hout) // bt
    kern = functools.partial(_conv2_fused_kernel, bt=bt, hout=hout)
    return pl.pallas_call(
        kern,
        out_shape=jax.ShapeDtypeStruct((rows, nout), h2d.dtype),
        grid_spec=pltpu.PrefetchScalarGridSpec(
            num_scalar_prefetch=0, grid=(nsteps,),
            in_specs=[pl.BlockSpec((bt * hout, wc_mid), lambda n: (n, 0)),
                      pl.BlockSpec((1, wc_mid), lambda n: (0, 0)),
                      pl.BlockSpec((1, wc_mid), lambda n: (0, 0)),
                      pl.BlockSpec((3, wc_mid, nout), lambda n: (0, 0, 0)),
                      pl.BlockSpec((bt * hout, nout), lambda n: (n, 0))],
            out_specs=pl.BlockSpec((bt * hout, nout), lambda n: (n, 0)),
            scratch_shapes=[pltpu.VMEM((bt * (hout + 2), wc_mid), jnp.float32)]),
        compiler_params=pltpu.CompilerParams(
            dimension_semantics=("parallel",),
            vmem_limit_bytes=_VMEM_LIMIT_BYTES),
    )(h2d, s_row, b_row, w_band, res2d)


# ---------------- one-time parameter preparation (hoisted out of forward) ------
def _make_banded_conv_weights(w_hwio, w_in, stride):
    """Fold a KHxKW conv (W-padding = KW//2, given stride) into KH banded
    matrices of shape (W*Cin, Wout*Cout) acting on channels-flattened rows.
    Out-of-range taps simply get no weight entries (implicit zero padding)."""
    kh, kw, cin, cout = w_hwio.shape
    pad = kw // 2
    w_out = (w_in + 2 * pad - kw) // stride + 1
    p = jnp.arange(w_in)[:, None, None]
    x = jnp.arange(w_out)[None, :, None]
    j = jnp.arange(kw)[None, None, :]
    t = (p == x * stride + j - pad).astype(w_hwio.dtype)          # (W, Wout, KW)
    w_band = jnp.einsum("pxj,ijab->ipaxb", t, w_hwio)             # (KH,W,Cin,Wout,Cout)
    return w_band.reshape(kh, w_in * cin, w_out * cout)


def _channel_pool_matrix(w_out, cout):
    k = jnp.arange(w_out * cout)[:, None]
    c = jnp.arange(cout)[None, :]
    return (k % cout == c).astype(jnp.float32)                    # (Wout*Cout, Cout)


def prepare_params(p, in_planes, planes, H, W, stride=1):
    """One-time OIHW->HWIO->banded weight conversion (shape-specialized)."""
    has_shortcut = (stride != 1) or (in_planes != planes)
    Wout = (W + 2 - 3) // stride + 1
    w1 = jnp.transpose(p["w1"], (2, 3, 1, 0))                     # OIHW -> HWIO
    w2 = jnp.transpose(p["w2"], (2, 3, 1, 0))
    q = {
        "bn1_gamma": p["bn1_gamma"], "bn1_beta": p["bn1_beta"],
        "bn2_gamma": p["bn2_gamma"], "bn2_beta": p["bn2_beta"],
        "w1_band": _make_banded_conv_weights(w1, W, stride),
        "w2_band": _make_banded_conv_weights(w2, Wout, 1),
        "pool1": _channel_pool_matrix(W, in_planes),
        "pool2": _channel_pool_matrix(Wout, planes),
    }
    if has_shortcut:
        wsc = jnp.transpose(p["w_sc"], (2, 3, 1, 0))              # (1,1,Cin,Cout)
        q["wsc_band"] = _make_banded_conv_weights(wsc, W, stride)[0]
    return q


# ---------------- PreActBlock forward ------------------------------------------
def preact_block_forward_nhwc(x_nhwc, q, in_planes, planes, stride=1):
    has_shortcut = (stride != 1) or (in_planes != planes)
    N, H, W, _ = x_nhwc.shape
    Hout = (H + 2 - 3) // stride + 1
    Wout = (W + 2 - 3) // stride + 1
    bt = _pick_batch_tile(N, H)

    x2d = x_nhwc.reshape(N * H, W * in_planes)       # free metadata reshape

    # bn1 batch statistics -> per-channel affine (scale, shift)
    xs, xsq = bn_batch_stats(x2d, q["pool1"], bt * H)
    cnt1 = float(N * H * W)
    m1 = xs / cnt1
    # TODO(synk): single-pass E[x^2]-E[x]^2 can cancel for large-mean inputs;
    # switch to a shifted/two-pass accumulation if inputs are not near zero-mean.
    v1 = jnp.maximum(xsq / cnt1 - m1 * m1, 0.0)      # biased variance, clamped
    s1 = q["bn1_gamma"] * lax.rsqrt(v1 + EPS)
    b1 = q["bn1_beta"] - m1 * s1
    s1_row = jnp.tile(s1, W)[None, :]
    b1_row = jnp.tile(b1, W)[None, :]

    h2d, sc2d, h_sum, h_sq = conv1_fused(
        x2d, s1_row, b1_row, q["w1_band"], q["pool2"], q.get("wsc_band"),
        bt=bt, h=H, hout=Hout, wout=Wout, cout=planes, stride=stride)

    cnt2 = float(N * Hout * Wout)
    m2 = h_sum / cnt2
    v2 = jnp.maximum(h_sq / cnt2 - m2 * m2, 0.0)
    s2 = q["bn2_gamma"] * lax.rsqrt(v2 + EPS)
    b2 = q["bn2_beta"] - m2 * s2
    s2_row = jnp.tile(s2, Wout)[None, :]
    b2_row = jnp.tile(b2, Wout)[None, :]

    res2d = sc2d if has_shortcut else x2d            # identity shortcut = x

    out2d = conv2_fused(h2d, s2_row, b2_row, q["w2_band"], res2d,
                        bt=bt, hout=Hout)
    return out2d.reshape(N, Hout, Wout, planes)


@functools.partial(jax.jit, static_argnames=("in_planes", "planes", "stride"))
def preact_block_forward(x_nchw, q, *, in_planes, planes, stride=1):
    # NCHW<->NHWC only at the model boundary; stacked blocks should stay NHWC.
    # TODO(synk): when stacking blocks, fuse each block's bn1 statistics into
    # the previous block's pass-3 epilogue to drop one HBM pass per block.
    x = jnp.transpose(x_nchw, (0, 2, 3, 1))
    out = preact_block_forward_nhwc(x, q, in_planes, planes, stride)
    return jnp.transpose(out, (0, 3, 1, 2))


# ---------------- deterministic parameter init (PyTorch-module shapes) ----------
def init_params(key, in_planes, planes):
    ks = jax.random.split(key, 7)
    return {
        "bn1_gamma": 1.0 + 0.1 * jax.random.normal(ks[0], (in_planes,), jnp.float32),
        "bn1_beta": 0.1 * jax.random.normal(ks[1], (in_planes,), jnp.float32),
        "bn2_gamma": 1.0 + 0.1 * jax.random.normal(ks[2], (planes,), jnp.float32),
        "bn2_beta": 0.1 * jax.random.normal(ks[3], (planes,), jnp.float32),
        "w1": 0.2 * jax.random.normal(ks[4], (planes, in_planes, 3, 3), jnp.float32),
        "w2": 0.2 * jax.random.normal(ks[5], (planes, planes, 3, 3), jnp.float32),
        "w_sc": 0.2 * jax.random.normal(ks[6], (planes, in_planes, 1, 1), jnp.float32),
    }


# ---------------- pure-JAX reference (NCHW, mirrors the PyTorch forward) --------
def reference_forward(x, p, in_planes, planes, stride=1):
    def bn(x, gamma, beta):
        mean = x.mean(axis=(0, 2, 3), keepdims=True)
        var = x.var(axis=(0, 2, 3), keepdims=True)   # biased, like torch normalization
        return (gamma.reshape(1, -1, 1, 1) * (x - mean) / jnp.sqrt(var + EPS)
                + beta.reshape(1, -1, 1, 1))

    dn = ("NCHW", "OIHW", "NCHW")
    hp = lax.Precision.HIGHEST                       # true-f32 reference convs
    out = jax.nn.relu(bn(x, p["bn1_gamma"], p["bn1_beta"]))
    if stride != 1 or in_planes != planes:
        shortcut = lax.conv_general_dilated(out, p["w_sc"], (stride, stride),
                                            "VALID", dimension_numbers=dn,
                                            precision=hp)
    else:
        shortcut = x
    h = lax.conv_general_dilated(out, p["w1"], (stride, stride),
                                 ((1, 1), (1, 1)), dimension_numbers=dn,
                                 precision=hp)
    h = jax.nn.relu(bn(h, p["bn2_gamma"], p["bn2_beta"]))
    h = lax.conv_general_dilated(h, p["w2"], (1, 1),
                                 ((1, 1), (1, 1)), dimension_numbers=dn,
                                 precision=hp)
    return h + shortcut


if __name__ == "__main__":
    key = jax.random.PRNGKey(0)
    kx1, kp1, kx2, kp2 = jax.random.split(key, 4)

    # Config 1: in_planes != planes -> 1x1 shortcut conv path.
    in_planes, planes, stride = 4, 8, 1
    x1 = jax.random.normal(kx1, (2, in_planes, 16, 16), jnp.float32)   # NCHW
    p1 = init_params(kp1, in_planes, planes)
    q1 = prepare_params(p1, in_planes, planes, 16, 16, stride)
    out1 = jax.block_until_ready(
        preact_block_forward(x1, q1, in_planes=in_planes, planes=planes, stride=stride))
    ref1 = reference_forward(x1, p1, in_planes, planes, stride)
    assert out1.shape == ref1.shape == (2, planes, 16, 16)
    err1 = float(jnp.max(jnp.abs(out1 - ref1)))
    assert err1 < 5e-3, f"shortcut-path max abs err {err1}"

    # Config 2: in_planes == planes, stride 1 -> identity shortcut path.
    in2, planes2 = 8, 8
    x2 = jax.random.normal(kx2, (2, in2, 16, 16), jnp.float32)
    p2 = init_params(kp2, in2, planes2)
    q2 = prepare_params(p2, in2, planes2, 16, 16, 1)
    out2 = jax.block_until_ready(
        preact_block_forward(x2, q2, in_planes=in2, planes=planes2, stride=1))
    ref2 = reference_forward(x2, p2, in2, planes2, 1)
    err2 = float(jnp.max(jnp.abs(out2 - ref2)))
    assert err2 < 5e-3, f"identity-path max abs err {err2}"

    print("KERNEL_OK")
</pallas_src>

<mosaic_0001>
module attributes {stable_mosaic.version = 11 : i64} {
  func.func @_bn_stats_kernel(%arg0: i32, %arg1: memref<32x64xf32, #tpu.memory_space<vmem>>, %arg2: memref<64x4xf32, #tpu.memory_space<vmem>>, %arg3: memref<1x4xf32, #tpu.memory_space<vmem>>, %arg4: memref<1x4xf32, #tpu.memory_space<vmem>>) attributes {dimension_semantics = [#tpu.dimension_semantics<arbitrary>], iteration_bounds = array<i64: 1>, scalar_prefetch = 0 : i64, scratch_operands = 0 : i64, tpu.core_type = #tpu.core_type<tc>, window_params = [{transform_indices = @transform_0, window_bounds = array<i64: 32, 64>}, {pipeline_mode = #tpu.pipeline_mode<synchronous>, transform_indices = @transform_1, window_bounds = array<i64: 64, 4>}, {pipeline_mode = #tpu.pipeline_mode<synchronous>, transform_indices = @transform_2, window_bounds = array<i64: 1, 4>}, {pipeline_mode = #tpu.pipeline_mode<synchronous>, transform_indices = @transform_3, window_bounds = array<i64: 1, 4>}]} {
    %c0_i32 = arith.constant 0 : i32
    %0 = arith.cmpi eq, %arg0, %c0_i32 : i32
    %1 = arith.extui %0 : i1 to i32
    %c0_i32_0 = arith.constant 0 : i32
    %2 = arith.cmpi ne, %1, %c0_i32_0 : i32
    scf.if %2 {
      %cst_17 = arith.constant 0.000000e+00 : f32
      %19 = vector.broadcast %cst_17 : f32 to vector<1x4xf32>
      %c0_18 = arith.constant 0 : index
      %c0_19 = arith.constant 0 : index
      %20 = vector.load %arg3[%c0_18, %c0_19] : memref<1x4xf32, #tpu.memory_space<vmem>>, vector<1x4xf32>
      tpu.vector_store %arg3[%c0_18, %c0_19], %19 {strides = array<i32>} : memref<1x4xf32, #tpu.memory_space<vmem>>, vector<1x4xf32>,
      %cst_20 = arith.constant 0.000000e+00 : f32
      %21 = vector.broadcast %cst_20 : f32 to vector<1x4xf32>
      %c0_21 = arith.constant 0 : index
      %c0_22 = arith.constant 0 : index
      %22 = vector.load %arg4[%c0_21, %c0_22] : memref<1x4xf32, #tpu.memory_space<vmem>>, vector<1x4xf32>
      tpu.vector_store %arg4[%c0_21, %c0_22], %21 {strides = array<i32>} : memref<1x4xf32, #tpu.memory_space<vmem>>, vector<1x4xf32>,
    } else {
    }
    %c0 = arith.constant 0 : index
    %c0_1 = arith.constant 0 : index
    %3 = vector.load %arg1[%c0, %c0_1] : memref<32x64xf32, #tpu.memory_space<vmem>>, vector<32x64xf32>
    %cst = arith.constant dense<0.000000e+00> : vector<64xf32>
    %4 = vector.multi_reduction <add>, %3, %cst [0] : vector<32x64xf32> to vector<64xf32>
    %5 = vector.shape_cast %4 : vector<64xf32> to vector<1x64xf32>
    %6 = arith.mulf %3, %3 : vector<32x64xf32>
    %cst_2 = arith.constant dense<0.000000e+00> : vector<64xf32>
    %7 = vector.multi_reduction <add>, %6, %cst_2 [0] : vector<32x64xf32> to vector<64xf32>
    %8 = vector.shape_cast %7 : vector<64xf32> to vector<1x64xf32>
    %c0_3 = arith.constant 0 : index
    %c0_4 = arith.constant 0 : index
    %9 = vector.load %arg3[%c0_3, %c0_4] : memref<1x4xf32, #tpu.memory_space<vmem>>, vector<1x4xf32>
    %c0_5 = arith.constant 0 : index
    %c0_6 = arith.constant 0 : index
    %10 = vector.load %arg2[%c0_5, %c0_6] : memref<64x4xf32, #tpu.memory_space<vmem>>, vector<64x4xf32>
    %cst_7 = arith.constant dense<0.000000e+00> : vector<1x4xf32>
    %11 = tpu.matmul %5, %10, %cst_7 {dimension_numbers = #tpu.dot_dimension_numbers<[1], [0], [0], [1], [0, 0, 1, 1], [], []>} : vector<1x64xf32>, vector<64x4xf32>, vector<1x4xf32> -> vector<1x4xf32>
    %12 = arith.addf %9, %11 : vector<1x4xf32>
    %c0_8 = arith.constant 0 : index
    %c0_9 = arith.constant 0 : index
    %13 = vector.load %arg3[%c0_8, %c0_9] : memref<1x4xf32, #tpu.memory_space<vmem>>, vector<1x4xf32>
    tpu.vector_store %arg3[%c0_8, %c0_9], %12 {strides = array<i32>} : memref<1x4xf32, #tpu.memory_space<vmem>>, vector<1x4xf32>,
    %c0_10 = arith.constant 0 : index
    %c0_11 = arith.constant 0 : index
    %14 = vector.load %arg4[%c0_10, %c0_11] : memref<1x4xf32, #tpu.memory_space<vmem>>, vector<1x4xf32>
    %c0_12 = arith.constant 0 : index
    %c0_13 = arith.constant 0 : index
    %15 = vector.load %arg2[%c0_12, %c0_13] : memref<64x4xf32, #tpu.memory_space<vmem>>, vector<64x4xf32>
    %cst_14 = arith.constant dense<0.000000e+00> : vector<1x4xf32>
    %16 = tpu.matmul %8, %15, %cst_14 {dimension_numbers = #tpu.dot_dimension_numbers<[1], [0], [0], [1], [0, 0, 1, 1], [], []>} : vector<1x64xf32>, vector<64x4xf32>, vector<1x4xf32> -> vector<1x4xf32>
    %17 = arith.addf %14, %16 : vector<1x4xf32>
    %c0_15 = arith.constant 0 : index
    %c0_16 = arith.constant 0 : index
    %18 = vector.load %arg4[%c0_15, %c0_16] : memref<1x4xf32, #tpu.memory_space<vmem>>, vector<1x4xf32>
    tpu.vector_store %arg4[%c0_15, %c0_16], %17 {strides = array<i32>} : memref<1x4xf32, #tpu.memory_space<vmem>>, vector<1x4xf32>,
    return
  }
  func.func @transform_0(%arg0: i32) -> (i32, i32) {
    %c0_i32 = arith.constant 0 : i32
    %c0_i32_0 = arith.constant 0 : i32
    return %arg0, %c0_i32 : i32, i32
  }
  func.func @transform_1(%arg0: i32) -> (i32, i32) {
    %c0_i32 = arith.constant 0 : i32
    %c0_i32_0 = arith.constant 0 : i32
    %c0_i32_1 = arith.constant 0 : i32
    return %c0_i32, %c0_i32_0 : i32, i32
  }
  func.func @transform_2(%arg0: i32) -> (i32, i32) {
    %c0_i32 = arith.constant 0 : i32
    %c0_i32_0 = arith.constant 0 : i32
    %c0_i32_1 = arith.constant 0 : i32
    return %c0_i32, %c0_i32_0 : i32, i32
  }
  func.func @transform_3(%arg0: i32) -> (i32, i32) {
    %c0_i32 = arith.constant 0 : i32
    %c0_i32_0 = arith.constant 0 : i32
    %c0_i32_1 = arith.constant 0 : i32
    return %c0_i32, %c0_i32_0 : i32, i32
  }
}

module attributes {stable_mosaic.version = 11 : i64} {
  func.func @_conv1_fused_kernel(%arg0: i32, %arg1: memref<32x64xf32, #tpu.memory_space<vmem>>, %arg2: memref<1x64xf32, #tpu.memory_space<vmem>>, %arg3: memref<1x64xf32, #tpu.memory_space<vmem>>, %arg4: memref<3x64x128xf32, #tpu.memory_space<vmem>>, %arg5: memref<128x8xf32, #tpu.memory_space<vmem>>, %arg6: memref<64x128xf32, #tpu.memory_space<vmem>>, %arg7: memref<32x128xf32, #tpu.memory_space<vmem>>, %arg8: memref<1x8xf32, #tpu.memory_space<vmem>>, %arg9: memref<1x8xf32, #tpu.memory_space<vmem>>, %arg10: memref<32x128xf32, #tpu.memory_space<vmem>>, %arg11: memref<36x64xf32, #tpu.memory_space<vmem>>) attributes {dimension_semantics = [#tpu.dimension_semantics<arbitrary>], iteration_bounds = array<i64: 1>, scalar_prefetch = 0 : i64, scratch_operands = 1 : i64, tpu.core_type = #tpu.core_type<tc>, window_params = [{transform_indices = @transform_0, window_bounds = array<i64: 32, 64>}, {pipeline_mode = #tpu.pipeline_mode<synchronous>, transform_indices = @transform_1, window_bounds = array<i64: 1, 64>}, {pipeline_mode = #tpu.pipeline_mode<synchronous>, transform_indices = @transform_2, window_bounds = array<i64: 1, 64>}, {pipeline_mode = #tpu.pipeline_mode<synchronous>, transform_indices = @transform_3, window_bounds = array<i64: 3, 64, 128>}, {pipeline_mode = #tpu.pipeline_mode<synchronous>, transform_indices = @transform_4, window_bounds = array<i64: 128, 8>}, {pipeline_mode = #tpu.pipeline_mode<synchronous>, transform_indices = @transform_5, window_bounds = array<i64: 64, 128>}, {transform_indices = @transform_6, window_bounds = array<i64: 32, 128>}, {pipeline_mode = #tpu.pipeline_mode<synchronous>, transform_indices = @transform_7, window_bounds = array<i64: 1, 8>}, {pipeline_mode = #tpu.pipeline_mode<synchronous>, transform_indices = @transform_8, window_bounds = array<i64: 1, 8>}, {transform_indices = @transform_9, window_bounds = array<i64: 32, 128>}]} {
    %c0_i32 = arith.constant 0 : i32
    %0 = arith.cmpi eq, %arg0, %c0_i32 : i32
    %1 = arith.extui %0 : i1 to i32
    %c0_i32_0 = arith.constant 0 : i32
    %2 = arith.cmpi ne, %1, %c0_i32_0 : i32
    scf.if %2 {
      %cst_57 = arith.constant 0.000000e+00 : f32
      %70 = vector.broadcast %cst_57 : f32 to vector<1x8xf32>
      %c0_58 = arith.constant 0 : index
      %c0_59 = arith.constant 0 : index
      %71 = vector.load %arg8[%c0_58, %c0_59] : memref<1x8xf32, #tpu.memory_space<vmem>>, vector<1x8xf32>
      tpu.vector_store %arg8[%c0_58, %c0_59], %70 {strides = array<i32>} : memref<1x8xf32, #tpu.memory_space<vmem>>, vector<1x8xf32>,
      %cst_60 = arith.constant 0.000000e+00 : f32
      %72 = vector.broadcast %cst_60 : f32 to vector<1x8xf32>
      %c0_61 = arith.constant 0 : index
      %c0_62 = arith.constant 0 : index
      %73 = vector.load %arg9[%c0_61, %c0_62] : memref<1x8xf32, #tpu.memory_space<vmem>>, vector<1x8xf32>
      tpu.vector_store %arg9[%c0_61, %c0_62], %72 {strides = array<i32>} : memref<1x8xf32, #tpu.memory_space<vmem>>, vector<1x8xf32>,
    } else {
    }
    %cst = arith.constant 0.000000e+00 : f32
    %3 = vector.broadcast %cst : f32 to vector<1x64xf32>
    %c0 = arith.constant 0 : index
    %c0_1 = arith.constant 0 : index
    %4 = vector.load %arg11[%c0, %c0_1] : memref<36x64xf32, #tpu.memory_space<vmem>>, vector<1x64xf32>
    tpu.vector_store %arg11[%c0, %c0_1], %3 {strides = array<i32>} : memref<36x64xf32, #tpu.memory_space<vmem>>, vector<1x64xf32>,
    %c17 = arith.constant 17 : index
    %c0_2 = arith.constant 0 : index
    %5 = vector.load %arg11[%c17, %c0_2] : memref<36x64xf32, #tpu.memory_space<vmem>>, vector<1x64xf32>
    tpu.vector_store %arg11[%c17, %c0_2], %3 {strides = array<i32>} : memref<36x64xf32, #tpu.memory_space<vmem>>, vector<1x64xf32>,
    %c18 = arith.constant 18 : index
    %c0_3 = arith.constant 0 : index
    %6 = vector.load %arg11[%c18, %c0_3] : memref<36x64xf32, #tpu.memory_space<vmem>>, vector<1x64xf32>
    tpu.vector_store %arg11[%c18, %c0_3], %3 {strides = array<i32>} : memref<36x64xf32, #tpu.memory_space<vmem>>, vector<1x64xf32>,
    %c35 = arith.constant 35 : index
    %c0_4 = arith.constant 0 : index
    %7 = vector.load %arg11[%c35, %c0_4] : memref<36x64xf32, #tpu.memory_space<vmem>>, vector<1x64xf32>
    tpu.vector_store %arg11[%c35, %c0_4], %3 {strides = array<i32>} : memref<36x64xf32, #tpu.memory_space<vmem>>, vector<1x64xf32>,
    %c0_5 = arith.constant 0 : index
    %c0_6 = arith.constant 0 : index
    %8 = vector.load %arg1[%c0_5, %c0_6] : memref<32x64xf32, #tpu.memory_space<vmem>>, vector<32x64xf32>
    %c0_7 = arith.constant 0 : index
    %c0_8 = arith.constant 0 : index
    %9 = vector.load %arg2[%c0_7, %c0_8] : memref<1x64xf32, #tpu.memory_space<vmem>>, vector<1x64xf32>
    %10 = vector.broadcast %9 : vector<1x64xf32> to vector<32x64xf32>
    %11 = arith.mulf %8, %10 : vector<32x64xf32>
    %c0_9 = arith.constant 0 : index
    %c0_10 = arith.constant 0 : index
    %12 = vector.load %arg3[%c0_9, %c0_10] : memref<1x64xf32, #tpu.memory_space<vmem>>, vector<1x64xf32>
    %13 = vector.broadcast %12 : vector<1x64xf32> to vector<32x64xf32>
    %14 = arith.addf %11, %13 : vector<32x64xf32>
    %cst_11 = arith.constant 0.000000e+00 : f32
    %15 = vector.broadcast %cst_11 : f32 to vector<32x64xf32>
    %16 = arith.maximumf %14, %15 : vector<32x64xf32>
    %17 = vector.extract_strided_slice %16 {offsets = [0, 0], sizes = [16, 64], strides = [1, 1]} : vector<32x64xf32> to vector<16x64xf32>
    %c1 = arith.constant 1 : index
    %c0_12 = arith.constant 0 : index
    %18 = vector.load %arg11[%c1, %c0_12] : memref<36x64xf32, #tpu.memory_space<vmem>>, vector<16x64xf32>
    tpu.vector_store %arg11[%c1, %c0_12], %17 {strides = array<i32>} : memref<36x64xf32, #tpu.memory_space<vmem>>, vector<16x64xf32>,
    %19 = vector.extract_strided_slice %16 {offsets = [16, 0], sizes = [16, 64], strides = [1, 1]} : vector<32x64xf32> to vector<16x64xf32>
    %c19 = arith.constant 19 : index
    %c0_13 = arith.constant 0 : index
    %20 = vector.load %arg11[%c19, %c0_13] : memref<36x64xf32, #tpu.memory_space<vmem>>, vector<16x64xf32>
    tpu.vector_store %arg11[%c19, %c0_13], %19 {strides = array<i32>} : memref<36x64xf32, #tpu.memory_space<vmem>>, vector<16x64xf32>,
    %c0_14 = arith.constant 0 : index
    %c0_15 = arith.constant 0 : index
    %c0_16 = arith.constant 0 : index
    %21 = vector.load %arg4[%c0_14, %c0_15, %c0_16] : memref<3x64x128xf32, #tpu.memory_space<vmem>>, vector<1x64x128xf32>
    %22 = vector.shape_cast %21 : vector<1x64x128xf32> to vector<64x128xf32>
    %c1_17 = arith.constant 1 : index
    %c0_18 = arith.constant 0 : index
    %c0_19 = arith.constant 0 : index
    %23 = vector.load %arg4[%c1_17, %c0_18, %c0_19] : memref<3x64x128xf32, #tpu.memory_space<vmem>>, vector<1x64x128xf32>
    %24 = vector.shape_cast %23 : vector<1x64x128xf32> to vector<64x128xf32>
    %c2 = arith.constant 2 : index
    %c0_20 = arith.constant 0 : index
    %c0_21 = arith.constant 0 : index
    %25 = vector.load %arg4[%c2, %c0_20, %c0_21] : memref<3x64x128xf32, #tpu.memory_space<vmem>>, vector<1x64x128xf32>
    %26 = vector.shape_cast %25 : vector<1x64x128xf32> to vector<64x128xf32>
    %cst_22 = arith.constant 0.000000e+00 : f32
    %27 = vector.broadcast %cst_22 : f32 to vector<1x128xf32>
    %cst_23 = arith.constant 0.000000e+00 : f32
    %28 = vector.broadcast %cst_23 : f32 to vector<1x128xf32>
    %cst_24 = arith.constant dense<0.000000e+00> : vector<32x128xf32>
    %29 = tpu.matmul %16, %24, %cst_24 {dimension_numbers = #tpu.dot_dimension_numbers<[1], [0], [0], [1], [0, 0, 1, 1], [], []>} : vector<32x64xf32>, vector<64x128xf32>, vector<32x128xf32> -> vector<32x128xf32>
    %c0_25 = arith.constant 0 : index
    %c0_26 = arith.constant 0 : index
    %30 = vector.load %arg11[%c0_25, %c0_26] : memref<36x64xf32, #tpu.memory_space<vmem>>, vector<34x64xf32>
    %cst_27 = arith.constant dense<0.000000e+00> : vector<34x128xf32>
    %31 = tpu.matmul %30, %22, %cst_27 {dimension_numbers = #tpu.dot_dimension_numbers<[1], [0], [0], [1], [0, 0, 1, 1], [], []>} : vector<34x64xf32>, vector<64x128xf32>, vector<34x128xf32> -> vector<34x128xf32>
    %c2_28 = arith.constant 2 : index
    %c0_29 = arith.constant 0 : index
    %32 = vector.load %arg11[%c2_28, %c0_29] : memref<36x64xf32, #tpu.memory_space<vmem>>, vector<34x64xf32>
    %cst_30 = arith.constant dense<0.000000e+00> : vector<34x128xf32>
    %33 = tpu.matmul %32, %26, %cst_30 {dimension_numbers = #tpu.dot_dimension_numbers<[1], [0], [0], [1], [0, 0, 1, 1], [], []>} : vector<34x64xf32>, vector<64x128xf32>, vector<34x128xf32> -> vector<34x128xf32>
    %34 = arith.addf %31, %33 : vector<34x128xf32>
    %c0_31 = arith.constant 0 : index
    %c0_32 = arith.constant 0 : index
    %35 = vector.load %arg6[%c0_31, %c0_32] : memref<64x128xf32, #tpu.memory_space<vmem>>, vector<64x128xf32>
    %cst_33 = arith.constant dense<0.000000e+00> : vector<32x128xf32>
    %36 = tpu.matmul %16, %35, %cst_33 {dimension_numbers = #tpu.dot_dimension_numbers<[1], [0], [0], [1], [0, 0, 1, 1], [], []>} : vector<32x64xf32>, vector<64x128xf32>, vector<32x128xf32> -> vector<32x128xf32>
    %c0_34 = arith.constant 0 : index
    %c0_35 = arith.constant 0 : index
    %37 = vector.load %arg10[%c0_34, %c0_35] : memref<32x128xf32, #tpu.memory_space<vmem>>, vector<32x128xf32>
    tpu.vector_store %arg10[%c0_34, %c0_35], %36 {strides = array<i32>} : memref<32x128xf32, #tpu.memory_space<vmem>>, vector<32x128xf32>,
    %38 = vector.extract_strided_slice %29 {offsets = [0, 0], sizes = [16, 128], strides = [1, 1]} : vector<32x128xf32> to vector<16x128xf32>
    %39 = vector.extract_strided_slice %34 {offsets = [0, 0], sizes = [16, 128], strides = [1, 1]} : vector<34x128xf32> to vector<16x128xf32>
    %40 = arith.addf %38, %39 : vector<16x128xf32>
    %cst_36 = arith.constant dense<0.000000e+00> : vector<128xf32>
    %41 = vector.multi_reduction <add>, %40, %cst_36 [0] : vector<16x128xf32> to vector<128xf32>
    %42 = vector.shape_cast %41 : vector<128xf32> to vector<1x128xf32>
    %43 = arith.addf %27, %42 : vector<1x128xf32>
    %44 = arith.mulf %40, %40 : vector<16x128xf32>
    %cst_37 = arith.constant dense<0.000000e+00> : vector<128xf32>
    %45 = vector.multi_reduction <add>, %44, %cst_37 [0] : vector<16x128xf32> to vector<128xf32>
    %46 = vector.shape_cast %45 : vector<128xf32> to vector<1x128xf32>
    %47 = arith.addf %28, %46 : vector<1x128xf32>
    %c0_38 = arith.constant 0 : index
    %c0_39 = arith.constant 0 : index
    %48 = vector.load %arg7[%c0_38, %c0_39] : memref<32x128xf32, #tpu.memory_space<vmem>>, vector<16x128xf32>
    tpu.vector_store %arg7[%c0_38, %c0_39], %40 {strides = array<i32>} : memref<32x128xf32, #tpu.memory_space<vmem>>, vector<16x128xf32>,
    %49 = vector.extract_strided_slice %29 {offsets = [16, 0], sizes = [16, 128], strides = [1, 1]} : vector<32x128xf32> to vector<16x128xf32>
    %50 = vector.extract_strided_slice %34 {offsets = [18, 0], sizes = [16, 128], strides = [1, 1]} : vector<34x128xf32> to vector<16x128xf32>
    %51 = arith.addf %49, %50 : vector<16x128xf32>
    %cst_40 = arith.constant dense<0.000000e+00> : vector<128xf32>
    %52 = vector.multi_reduction <add>, %51, %cst_40 [0] : vector<16x128xf32> to vector<128xf32>
    %53 = vector.shape_cast %52 : vector<128xf32> to vector<1x128xf32>
    %54 = arith.addf %43, %53 : vector<1x128xf32>
    %55 = arith.mulf %51, %51 : vector<16x128xf32>
    %cst_41 = arith.constant dense<0.000000e+00> : vector<128xf32>
    %56 = vector.multi_reduction <add>, %55, %cst_41 [0] : vector<16x128xf32> to vector<128xf32>
    %57 = vector.shape_cast %56 : vector<128xf32> to vector<1x128xf32>
    %58 = arith.addf %47, %57 : vector<1x128xf32>
    %c16 = arith.constant 16 : index
    %c0_42 = arith.constant 0 : index
    %59 = vector.load %arg7[%c16, %c0_42] : memref<32x128xf32, #tpu.memory_space<vmem>>, vector<16x128xf32>
    tpu.vector_store %arg7[%c16, %c0_42], %51 {strides = array<i32>} : memref<32x128xf32, #tpu.memory_space<vmem>>, vector<16x128xf32>,
    %c0_43 = arith.constant 0 : index
    %c0_44 = arith.constant 0 : index
    %60 = vector.load %arg8[%c0_43, %c0_44] : memref<1x8xf32, #tpu.memory_space<vmem>>, vector<1x8xf32>
    %c0_45 = arith.constant 0 : index
    %c0_46 = arith.constant 0 : index
    %61 = vector.load %arg5[%c0_45, %c0_46] : memref<128x8xf32, #tpu.memory_space<vmem>>, vector<128x8xf32>
    %cst_47 = arith.constant dense<0.000000e+00> : vector<1x8xf32>
    %62 = tpu.matmul %54, %61, %cst_47 {dimension_numbers = #tpu.dot_dimension_numbers<[1], [0], [0], [1], [0, 0, 1, 1], [], []>} : vector<1x128xf32>, vector<128x8xf32>, vector<1x8xf32> -> vector<1x8xf32>
    %63 = arith.addf %60, %62 : vector<1x8xf32>
    %c0_48 = arith.constant 0 : index
    %c0_49 = arith.constant 0 : index
    %64 = vector.load %arg8[%c0_48, %c0_49] : memref<1x8xf32, #tpu.memory_space<vmem>>, vector<1x8xf32>
    tpu.vector_store %arg8[%c0_48, %c0_49], %63 {strides = array<i32>} : memref<1x8xf32, #tpu.memory_space<vmem>>, vector<1x8xf32>,
    %c0_50 = arith.constant 0 : index
    %c0_51 = arith.constant 0 : index
    %65 = vector.load %arg9[%c0_50, %c0_51] : memref<1x8xf32, #tpu.memory_space<vmem>>, vector<1x8xf32>
    %c0_52 = arith.constant 0 : index
    %c0_53 = arith.constant 0 : index
    %66 = vector.load %arg5[%c0_52, %c0_53] : memref<128x8xf32, #tpu.memory_space<vmem>>, vector<128x8xf32>
    %cst_54 = arith.constant dense<0.000000e+00> : vector<1x8xf32>
    %67 = tpu.matmul %58, %66, %cst_54 {dimension_numbers = #tpu.dot_dimension_numbers<[1], [0], [0], [1], [0, 0, 1, 1], [], []>} : vector<1x128xf32>, vector<128x8xf32>, vector<1x8xf32> -> vector<1x8xf32>
    %68 = arith.addf %65, %67 : vector<1x8xf32>
    %c0_55 = arith.constant 0 : index
    %c0_56 = arith.constant 0 : index
    %69 = vector.load %arg9[%c0_55, %c0_56] : memref<1x8xf32, #tpu.memory_space<vmem>>, vector<1x8xf32>
    tpu.vector_store %arg9[%c0_55, %c0_56], %68 {strides = array<i32>} : memref<1x8xf32, #tpu.memory_space<vmem>>, vector<1x8xf32>,
    return
  }
  func.func @transform_0(%arg0: i32) -> (i32, i32) {
    %c0_i32 = arith.constant 0 : i32
    %c0_i32_0 = arith.constant 0 : i32
    return %arg0, %c0_i32 : i32, i32
  }
  func.func @transform_1(%arg0: i32) -> (i32, i32) {
    %c0_i32 = arith.constant 0 : i32
    %c0_i32_0 = arith.constant 0 : i32
    %c0_i32_1 = arith.constant 0 : i32
    return %c0_i32, %c0_i32_0 : i32, i32
  }
  func.func @transform_2(%arg0: i32) -> (i32, i32) {
    %c0_i32 = arith.constant 0 : i32
    %c0_i32_0 = arith.constant 0 : i32
    %c0_i32_1 = arith.constant 0 : i32
    return %c0_i32, %c0_i32_0 : i32, i32
  }
  func.func @transform_3(%arg0: i32) -> (i32, i32, i32) {
    %c0_i32 = arith.constant 0 : i32
    %c0_i32_0 = arith.constant 0 : i32
    %c0_i32_1 = arith.constant 0 : i32
    %c0_i32_2 = arith.constant 0 : i32
    return %c0_i32, %c0_i32_0, %c0_i32_1 : i32, i32, i32
  }
  func.func @transform_4(%arg0: i32) -> (i32, i32) {
    %c0_i32 = arith.constant 0 : i32
    %c0_i32_0 = arith.constant 0 : i32
    %c0_i32_1 = arith.constant 0 : i32
    return %c0_i32, %c0_i32_0 : i32, i32
  }
  func.func @transform_5(%arg0: i32) -> (i32, i32) {
    %c0_i32 = arith.constant 0 : i32
    %c0_i32_0 = arith.constant 0 : i32
    %c0_i32_1 = arith.constant 0 : i32
    return %c0_i32, %c0_i32_0 : i32, i32
  }
  func.func @transform_6(%arg0: i32) -> (i32, i32) {
    %c0_i32 = arith.constant 0 : i32
    %c0_i32_0 = arith.constant 0 : i32
    return %arg0, %c0_i32 : i32, i32
  }
  func.func @transform_7(%arg0: i32) -> (i32, i32) {
    %c0_i32 = arith.constant 0 : i32
    %c0_i32_0 = arith.constant 0 : i32
    %c0_i32_1 = arith.constant 0 : i32
    return %c0_i32, %c0_i32_0 : i32, i32
  }
  func.func @transform_8(%arg0: i32) -> (i32, i32) {
    %c0_i32 = arith.constant 0 : i32
    %c0_i32_0 = arith.constant 0 : i32
    %c0_i32_1 = arith.constant 0 : i32
    return %c0_i32, %c0_i32_0 : i32, i32
  }
  func.func @transform_9(%arg0: i32) -> (i32, i32) {
    %c0_i32 = arith.constant 0 : i32
    %c0_i32_0 = arith.constant 0 : i32
    return %arg0, %c0_i32 : i32, i32
  }
}

module attributes {stable_mosaic.version = 11 : i64} {
  func.func @_conv2_fused_kernel(%arg0: i32, %arg1: memref<32x128xf32, #tpu.memory_space<vmem>>, %arg2: memref<1x128xf32, #tpu.memory_space<vmem>>, %arg3: memref<1x128xf32, #tpu.memory_space<vmem>>, %arg4: memref<3x128x128xf32, #tpu.memory_space<vmem>>, %arg5: memref<32x128xf32, #tpu.memory_space<vmem>>, %arg6: memref<32x128xf32, #tpu.memory_space<vmem>>, %arg7: memref<36x128xf32, #tpu.memory_space<vmem>>) attributes {dimension_semantics = [#tpu.dimension_semantics<parallel>], iteration_bounds = array<i64: 1>, scalar_prefetch = 0 : i64, scratch_operands = 1 : i64, tpu.core_type = #tpu.core_type<tc>, window_params = [{transform_indices = @transform_0, window_bounds = array<i64: 32, 128>}, {pipeline_mode = #tpu.pipeline_mode<synchronous>, transform_indices = @transform_1, window_bounds = array<i64: 1, 128>}, {pipeline_mode = #tpu.pipeline_mode<synchronous>, transform_indices = @transform_2, window_bounds = array<i64: 1, 128>}, {pipeline_mode = #tpu.pipeline_mode<synchronous>, transform_indices = @transform_3, window_bounds = array<i64: 3, 128, 128>}, {transform_indices = @transform_4, window_bounds = array<i64: 32, 128>}, {transform_indices = @transform_5, window_bounds = array<i64: 32, 128>}]} {
    %cst = arith.constant 0.000000e+00 : f32
    %0 = vector.broadcast %cst : f32 to vector<1x128xf32>
    %c0 = arith.constant 0 : index
    %c0_0 = arith.constant 0 : index
    %1 = vector.load %arg7[%c0, %c0_0] : memref<36x128xf32, #tpu.memory_space<vmem>>, vector<1x128xf32>
    tpu.vector_store %arg7[%c0, %c0_0], %0 {strides = array<i32>} : memref<36x128xf32, #tpu.memory_space<vmem>>, vector<1x128xf32>,
    %c17 = arith.constant 17 : index
    %c0_1 = arith.constant 0 : index
    %2 = vector.load %arg7[%c17, %c0_1] : memref<36x128xf32, #tpu.memory_space<vmem>>, vector<1x128xf32>
    tpu.vector_store %arg7[%c17, %c0_1], %0 {strides = array<i32>} : memref<36x128xf32, #tpu.memory_space<vmem>>, vector<1x128xf32>,
    %c18 = arith.constant 18 : index
    %c0_2 = arith.constant 0 : index
    %3 = vector.load %arg7[%c18, %c0_2] : memref<36x128xf32, #tpu.memory_space<vmem>>, vector<1x128xf32>
    tpu.vector_store %arg7[%c18, %c0_2], %0 {strides = array<i32>} : memref<36x128xf32, #tpu.memory_space<vmem>>, vector<1x128xf32>,
    %c35 = arith.constant 35 : index
    %c0_3 = arith.constant 0 : index
    %4 = vector.load %arg7[%c35, %c0_3] : memref<36x128xf32, #tpu.memory_space<vmem>>, vector<1x128xf32>
    tpu.vector_store %arg7[%c35, %c0_3], %0 {strides = array<i32>} : memref<36x128xf32, #tpu.memory_space<vmem>>, vector<1x128xf32>,
    %c0_4 = arith.constant 0 : index
    %c0_5 = arith.constant 0 : index
    %5 = vector.load %arg1[%c0_4, %c0_5] : memref<32x128xf32, #tpu.memory_space<vmem>>, vector<32x128xf32>
    %c0_6 = arith.constant 0 : index
    %c0_7 = arith.constant 0 : index
    %6 = vector.load %arg2[%c0_6, %c0_7] : memref<1x128xf32, #tpu.memory_space<vmem>>, vector<1x128xf32>
    %7 = vector.broadcast %6 : vector<1x128xf32> to vector<32x128xf32>
    %8 = arith.mulf %5, %7 : vector<32x128xf32>
    %c0_8 = arith.constant 0 : index
    %c0_9 = arith.constant 0 : index
    %9 = vector.load %arg3[%c0_8, %c0_9] : memref<1x128xf32, #tpu.memory_space<vmem>>, vector<1x128xf32>
    %10 = vector.broadcast %9 : vector<1x128xf32> to vector<32x128xf32>
    %11 = arith.addf %8, %10 : vector<32x128xf32>
    %cst_10 = arith.constant 0.000000e+00 : f32
    %12 = vector.broadcast %cst_10 : f32 to vector<32x128xf32>
    %13 = arith.maximumf %11, %12 : vector<32x128xf32>
    %14 = vector.extract_strided_slice %13 {offsets = [0, 0], sizes = [16, 128], strides = [1, 1]} : vector<32x128xf32> to vector<16x128xf32>
    %c1 = arith.constant 1 : index
    %c0_11 = arith.constant 0 : index
    %15 = vector.load %arg7[%c1, %c0_11] : memref<36x128xf32, #tpu.memory_space<vmem>>, vector<16x128xf32>
    tpu.vector_store %arg7[%c1, %c0_11], %14 {strides = array<i32>} : memref<36x128xf32, #tpu.memory_space<vmem>>, vector<16x128xf32>,
    %16 = vector.extract_strided_slice %13 {offsets = [16, 0], sizes = [16, 128], strides = [1, 1]} : vector<32x128xf32> to vector<16x128xf32>
    %c19 = arith.constant 19 : index
    %c0_12 = arith.constant 0 : index
    %17 = vector.load %arg7[%c19, %c0_12] : memref<36x128xf32, #tpu.memory_space<vmem>>, vector<16x128xf32>
    tpu.vector_store %arg7[%c19, %c0_12], %16 {strides = array<i32>} : memref<36x128xf32, #tpu.memory_space<vmem>>, vector<16x128xf32>,
    %c0_13 = arith.constant 0 : index
    %c0_14 = arith.constant 0 : index
    %c0_15 = arith.constant 0 : index
    %18 = vector.load %arg4[%c0_13, %c0_14, %c0_15] : memref<3x128x128xf32, #tpu.memory_space<vmem>>, vector<1x128x128xf32>
    %19 = vector.shape_cast %18 : vector<1x128x128xf32> to vector<128x128xf32>
    %c1_16 = arith.constant 1 : index
    %c0_17 = arith.constant 0 : index
    %c0_18 = arith.constant 0 : index
    %20 = vector.load %arg4[%c1_16, %c0_17, %c0_18] : memref<3x128x128xf32, #tpu.memory_space<vmem>>, vector<1x128x128xf32>
    %21 = vector.shape_cast %20 : vector<1x128x128xf32> to vector<128x128xf32>
    %c2 = arith.constant 2 : index
    %c0_19 = arith.constant 0 : index
    %c0_20 = arith.constant 0 : index
    %22 = vector.load %arg4[%c2, %c0_19, %c0_20] : memref<3x128x128xf32, #tpu.memory_space<vmem>>, vector<1x128x128xf32>
    %23 = vector.shape_cast %22 : vector<1x128x128xf32> to vector<128x128xf32>
    %cst_21 = arith.constant dense<0.000000e+00> : vector<32x128xf32>
    %24 = tpu.matmul %13, %21, %cst_21 {dimension_numbers = #tpu.dot_dimension_numbers<[1], [0], [0], [1], [0, 0, 1, 1], [], []>} : vector<32x128xf32>, vector<128x128xf32>, vector<32x128xf32> -> vector<32x128xf32>
    %c0_22 = arith.constant 0 : index
    %c0_23 = arith.constant 0 : index
    %25 = vector.load %arg5[%c0_22, %c0_23] : memref<32x128xf32, #tpu.memory_space<vmem>>, vector<32x128xf32>
    %26 = arith.addf %24, %25 : vector<32x128xf32>
    %c0_24 = arith.constant 0 : index
    %c0_25 = arith.constant 0 : index
    %27 = vector.load %arg7[%c0_24, %c0_25] : memref<36x128xf32, #tpu.memory_space<vmem>>, vector<34x128xf32>
    %cst_26 = arith.constant dense<0.000000e+00> : vector<34x128xf32>
    %28 = tpu.matmul %27, %19, %cst_26 {dimension_numbers = #tpu.dot_dimension_numbers<[1], [0], [0], [1], [0, 0, 1, 1], [], []>} : vector<34x128xf32>, vector<128x128xf32>, vector<34x128xf32> -> vector<34x128xf32>
    %c2_27 = arith.constant 2 : index
    %c0_28 = arith.constant 0 : index
    %29 = vector.load %arg7[%c2_27, %c0_28] : memref<36x128xf32, #tpu.memory_space<vmem>>, vector<34x128xf32>
    %cst_29 = arith.constant dense<0.000000e+00> : vector<34x128xf32>
    %30 = tpu.matmul %29, %23, %cst_29 {dimension_numbers = #tpu.dot_dimension_numbers<[1], [0], [0], [1], [0, 0, 1, 1], [], []>} : vector<34x128xf32>, vector<128x128xf32>, vector<34x128xf32> -> vector<34x128xf32>
    %31 = arith.addf %28, %30 : vector<34x128xf32>
    %32 = vector.extract_strided_slice %26 {offsets = [0, 0], sizes = [16, 128], strides = [1, 1]} : vector<32x128xf32> to vector<16x128xf32>
    %33 = vector.extract_strided_slice %31 {offsets = [0, 0], sizes = [16, 128], strides = [1, 1]} : vector<34x128xf32> to vector<16x128xf32>
    %34 = arith.addf %32, %33 : vector<16x128xf32>
    %c0_30 = arith.constant 0 : index
    %c0_31 = arith.constant 0 : index
    %35 = vector.load %arg6[%c0_30, %c0_31] : memref<32x128xf32, #tpu.memory_space<vmem>>, vector<16x128xf32>
    tpu.vector_store %arg6[%c0_30, %c0_31], %34 {strides = array<i32>} : memref<32x128xf32, #tpu.memory_space<vmem>>, vector<16x128xf32>,
    %36 = vector.extract_strided_slice %26 {offsets = [16, 0], sizes = [16, 128], strides = [1, 1]} : vector<32x128xf32> to vector<16x128xf32>
    %37 = vector.extract_strided_slice %31 {offsets = [18, 0], sizes = [16, 128], strides = [1, 1]} : vector<34x128xf32> to vector<16x128xf32>
    %38 = arith.addf %36, %37 : vector<16x128xf32>
    %c16 = arith.constant 16 : index
    %c0_32 = arith.constant 0 : index
    %39 = vector.load %arg6[%c16, %c0_32] : memref<32x128xf32, #tpu.memory_space<vmem>>, vector<16x128xf32>
    tpu.vector_store %arg6[%c16, %c0_32], %38 {strides = array<i32>} : memref<32x128xf32, #tpu.memory_space<vmem>>, vector<16x128xf32>,
    return
  }
  func.func @transform_0(%arg0: i32) -> (i32, i32) {
    %c0_i32 = arith.constant 0 : i32
    %c0_i32_0 = arith.constant 0 : i32
    return %arg0, %c0_i32 : i32, i32
  }
  func.func @transform_1(%arg0: i32) -> (i32, i32) {
    %c0_i32 = arith.constant 0 : i32
    %c0_i32_0 = arith.constant 0 : i32
    %c0_i32_1 = arith.constant 0 : i32
    return %c0_i32, %c0_i32_0 : i32, i32
  }
  func.func @transform_2(%arg0: i32) -> (i32, i32) {
    %c0_i32 = arith.constant 0 : i32
    %c0_i32_0 = arith.constant 0 : i32
    %c0_i32_1 = arith.constant 0 : i32
    return %c0_i32, %c0_i32_0 : i32, i32
  }
  func.func @transform_3(%arg0: i32) -> (i32, i32, i32) {
    %c0_i32 = arith.constant 0 : i32
    %c0_i32_0 = arith.constant 0 : i32
    %c0_i32_1 = arith.constant 0 : i32
    %c0_i32_2 = arith.constant 0 : i32
    return %c0_i32, %c0_i32_0, %c0_i32_1 : i32, i32, i32
  }
  func.func @transform_4(%arg0: i32) -> (i32, i32) {
    %c0_i32 = arith.constant 0 : i32
    %c0_i32_0 = arith.constant 0 : i32
    return %arg0, %c0_i32 : i32, i32
  }
  func.func @transform_5(%arg0: i32) -> (i32, i32) {
    %c0_i32 = arith.constant 0 : i32
    %c0_i32_0 = arith.constant 0 : i32
    return %arg0, %c0_i32 : i32, i32
  }
}

</mosaic_0001>

<llo_original>
// kernel: tile.28
$region0: #{tile.28}
  #allocation0 [shape = 's32[1]{0}', space=sflag, size = 0x4, scoped, tag = 'scoped memory for tile.28']
  %s0 = inlined_call_operand.vmem [shape: f32[4], index: 0, kind: input, shape index: {}]
  %s1 = inlined_call_operand.vmem [shape: f32[16,4], index: 1, kind: output, shape index: {}]
  // Predicated region
  $region2: #{tile.28} parent=0 // pred_check
    _
  $region3: #{tile.28} parent=0 // pred_check_branch
    %3 = sbr.rel (0) target = $region5
  $region4: #{tile.28} parent=0 // pred_region
    _
  $region5: #{tile.28} parent=0 // pred_fallthru
    _
  %v4 = vld [vmem:[%s0] ss:$0 sm:$0xff]
  %5 = vst [vmem:[%s1] sm:$0xff] %v4
  %s6 = scalar_lea.vmem %s1, 8
  %7 = vst [vmem:[%s6] sm:$0xff] %v4

// kernel: tile.29
$region0: #{tile.29}
  %s0 = inlined_call_operand.vmem [shape: f32[16,4], index: 0, kind: input, shape index: {}]
  %s1 = inlined_call_operand.vmem [shape: f32[1,64], index: 1, kind: output, shape index: {}]
  $region1: #{tile.29} parent=0
    #allocation0 [shape = 'u8[4096]{0}', space=vmem, size = 0x1000, scoped, tag = 'scoped mem for output reshape']
    %v2 = vld [vmem:[%s0] sm:$0x1]
    %vm3 = vcmask 31744
    %4 = vst.msk [vmem:[#allocation0] sm:$0x1] %vm3, %v2
    %s5 = scalar_lea.vmem %s0, 15
    %v6 = vld [vmem:[%s5] sm:$0x1]
    %7 = vrot.lane.b32.xlu0 %v6, 60
    %v8 = vpop.permute.xlu0 %7
    %vm9 = vcmask 523744
    %10 = vst.msk [vmem:[#allocation0] sm:$0x1] %vm9, %v8
    %s11 = scalar_lea.vmem %s0, 14
    %v12 = vld [vmem:[%s11] sm:$0x1]
    %13 = vrot.lane.b32.xlu0 %v12, 56
    %v14 = vpop.permute.xlu0 %13
    %vm15 = vcmask 490944
    %16 = vst.msk [vmem:[#allocation0] sm:$0x1] %vm15, %v14
    %s17 = scalar_lea.vmem %s0, 13
    %v18 = vld [vmem:[%s17] sm:$0x1]
    %19 = vrot.lane.b32.xlu0 %v18, 52
    %v20 = vpop.permute.xlu0 %19
    %vm21 = vcmask 458144
    %22 = vst.msk [vmem:[#allocation0] sm:$0x1] %vm21, %v20
    %s23 = scalar_lea.vmem %s0, 12
    %v24 = vld [vmem:[%s23] sm:$0x1]
    %25 = vrot.lane.b32.xlu0 %v24, 48
    %v26 = vpop.permute.xlu0 %25
    %vm27 = vcmask 425344
    %28 = vst.msk [vmem:[#allocation0] sm:$0x1] %vm27, %v26
    %s29 = scalar_lea.vmem %s0, 11
    %v30 = vld [vmem:[%s29] sm:$0x1]
    %31 = vrot.lane.b32.xlu0 %v30, 44
    %v32 = vpop.permute.xlu0 %31
    %vm33 = vcmask 392544
    %34 = vst.msk [vmem:[#allocation0] sm:$0x1] %vm33, %v32
    %s35 = scalar_lea.vmem %s0, 10
    %v36 = vld [vmem:[%s35] sm:$0x1]
    %37 = vrot.lane.b32.xlu0 %v36, 40
    %v38 = vpop.permute.xlu0 %37
    %vm39 = vcmask 359744
    %40 = vst.msk [vmem:[#allocation0] sm:$0x1] %vm39, %v38
    %s41 = scalar_lea.vmem %s0, 9
    %v42 = vld [vmem:[%s41] sm:$0x1]
    %43 = vrot.lane.b32.xlu0 %v42, 36
    %v44 = vpop.permute.xlu0 %43
    %vm45 = vcmask 326944
    %46 = vst.msk [vmem:[#allocation0] sm:$0x1] %vm45, %v44
    %s47 = scalar_lea.vmem %s0, 8
    %v48 = vld [vmem:[%s47] sm:$0x1]
    %49 = vrot.lane.b32.xlu0 %v48, 32
    %v50 = vpop.permute.xlu0 %49
    %vm51 = vcmask 294144
    %52 = vst.msk [vmem:[#allocation0] sm:$0x1] %vm51, %v50
    %s53 = scalar_lea.vmem %s0, 7
    %v54 = vld [vmem:[%s53] sm:$0x1]
    %55 = vrot.lane.b32.xlu0 %v54, 28
    %v56 = vpop.permute.xlu0 %55
    %vm57 = vcmask 261344
    %58 = vst.msk [vmem:[#allocation0] sm:$0x1] %vm57, %v56
    %s59 = scalar_lea.vmem %s0, 6
    %v60 = vld [vmem:[%s59] sm:$0x1]
    %61 = vrot.lane.b32.xlu0 %v60, 24
    %v62 = vpop.permute.xlu0 %61
    %vm63 = vcmask 228544
    %64 = vst.msk [vmem:[#allocation0] sm:$0x1] %vm63, %v62
    %s65 = scalar_lea.vmem %s0, 5
    %v66 = vld [vmem:[%s65] sm:$0x1]
    %67 = vrot.lane.b32.xlu0 %v66, 20
    %v68 = vpop.permute.xlu0 %67
    %vm69 = vcmask 195744
    %70 = vst.msk [vmem:[#allocation0] sm:$0x1] %vm69, %v68
    %s71 = scalar_lea.vmem %s0, 4
    %v72 = vld [vmem:[%s71] sm:$0x1]
    %73 = vrot.lane.b32.xlu0 %v72, 16
    %v74 = vpop.permute.xlu0 %73
    %vm75 = vcmask 162944
    %76 = vst.msk [vmem:[#allocation0] sm:$0x1] %vm75, %v74
    %s77 = scalar_lea.vmem %s0, 3
    %v78 = vld [vmem:[%s77] sm:$0x1]
    %79 = vrot.lane.b32.xlu0 %v78, 12
    %v80 = vpop.permute.xlu0 %79
    %vm81 = vcmask 130144
    %82 = vst.msk [vmem:[#allocation0] sm:$0x1] %vm81, %v80
    %s83 = scalar_lea.vmem %s0, 2
    %v84 = vld [vmem:[%s83] sm:$0x1]
    %85 = vrot.lane.b32.xlu0 %v84, 8
    %v86 = vpop.permute.xlu0 %85
    %vm87 = vcmask 97344
    %88 = vst.msk [vmem:[#allocation0] sm:$0x1] %vm87, %v86
    %s89 = scalar_lea.vmem %s0, 1
    %v90 = vld [vmem:[%s89] sm:$0x1]
    %91 = vrot.lane.b32.xlu0 %v90, 4
    %v92 = vpop.permute.xlu0 %91
    %vm93 = vcmask 64544
    %94 = vst.msk [vmem:[#allocation0] sm:$0x1] %vm93, %v92
    %s96 = sshllo.u32 0, 1
    %v98 = vld [vmem:[#allocation0] sm:%s96]
    %s99 = sshllo.u32 0, 1
    %100 = vst [vmem:[%s1] sm:%s99] %v98

// kernel: tile.38
$region0: #{tile.38}
  #allocation0 [shape = 's32[1]{0}', space=sflag, size = 0x4, scoped, tag = 'scoped memory for tile.38']
  %s0 = inlined_call_operand.vmem [shape: f32[8], index: 0, kind: input, shape index: {}]
  %s1 = inlined_call_operand.vmem [shape: f32[16,8], index: 1, kind: output, shape index: {}]
  // Predicated region
  $region2: #{tile.38} parent=0 // pred_check
    _
  $region3: #{tile.38} parent=0 // pred_check_branch
    %3 = sbr.rel (0) target = $region5
  $region4: #{tile.38} parent=0 // pred_region
    _
  $region5: #{tile.38} parent=0 // pred_fallthru
    _
  %v4 = vld [vmem:[%s0] ss:$0 sm:$0xff]
  %5 = vst [vmem:[%s1] sm:$0xff] %v4
  %s6 = scalar_lea.vmem %s1, 8
  %7 = vst [vmem:[%s6] sm:$0xff] %v4

// kernel: tile.39
$region0: #{tile.39}
  %s0 = inlined_call_operand.vmem [shape: f32[16,8], index: 0, kind: input, shape index: {}]
  %s1 = inlined_call_operand.vmem [shape: f32[1,128], index: 1, kind: output, shape index: {}]
  $region1: #{tile.39} parent=0
    #allocation0 [shape = 'u8[4096]{0}', space=vmem, size = 0x1000, scoped, tag = 'scoped mem for output reshape']
    %v2 = vld [vmem:[%s0] sm:$0x1]
    %vm3 = vcmask 64512
    %4 = vst.msk [vmem:[#allocation0] sm:$0x1] %vm3, %v2
    %s5 = scalar_lea.vmem %s0, 15
    %v6 = vld [vmem:[%s5] sm:$0x1]
    %7 = vrot.lane.b32.xlu0 %v6, 120
    %v8 = vpop.permute.xlu0 %7
    %vm9 = vcmask 1048512
    %10 = vst.msk [vmem:[#allocation0] sm:$0x1] %vm9, %v8
    %s11 = scalar_lea.vmem %s0, 14
    %v12 = vld [vmem:[%s11] sm:$0x1]
    %13 = vrot.lane.b32.xlu0 %v12, 112
    %v14 = vpop.permute.xlu0 %13
    %vm15 = vcmask 982912
    %16 = vst.msk [vmem:[#allocation0] sm:$0x1] %vm15, %v14
    %s17 = scalar_lea.vmem %s0, 13
    %v18 = vld [vmem:[%s17] sm:$0x1]
    %19 = vrot.lane.b32.xlu0 %v18, 104
    %v20 = vpop.permute.xlu0 %19
    %vm21 = vcmask 917312
    %22 = vst.msk [vmem:[#allocation0] sm:$0x1] %vm21, %v20
    %s23 = scalar_lea.vmem %s0, 12
    %v24 = vld [vmem:[%s23] sm:$0x1]
    %25 = vrot.lane.b32.xlu0 %v24, 96
    %v26 = vpop.permute.xlu0 %25
    %vm27 = vcmask 851712
    %28 = vst.msk [vmem:[#allocation0] sm:$0x1] %vm27, %v26
    %s29 = scalar_lea.vmem %s0, 11
    %v30 = vld [vmem:[%s29] sm:$0x1]
    %31 = vrot.lane.b32.xlu0 %v30, 88
    %v32 = vpop.permute.xlu0 %31
    %vm33 = vcmask 786112
    %34 = vst.msk [vmem:[#allocation0] sm:$0x1] %vm33, %v32
    %s35 = scalar_lea.vmem %s0, 10
    %v36 = vld [vmem:[%s35] sm:$0x1]
    %37 = vrot.lane.b32.xlu0 %v36, 80
    %v38 = vpop.permute.xlu0 %37
    %vm39 = vcmask 720512
    %40 = vst.msk [vmem:[#allocation0] sm:$0x1] %vm39, %v38
    %s41 = scalar_lea.vmem %s0, 9
    %v42 = vld [vmem:[%s41] sm:$0x1]
    %43 = vrot.lane.b32.xlu0 %v42, 72
    %v44 = vpop.permute.xlu0 %43
    %vm45 = vcmask 654912
    %46 = vst.msk [vmem:[#allocation0] sm:$0x1] %vm45, %v44
    %s47 = scalar_lea.vmem %s0, 8
    %v48 = vld [vmem:[%s47] sm:$0x1]
    %49 = vrot.lane.b32.xlu0 %v48, 64
    %v50 = vpop.permute.xlu0 %49
    %vm51 = vcmask 589312
    %52 = vst.msk [vmem:[#allocation0] sm:$0x1] %vm51, %v50
    %s53 = scalar_lea.vmem %s0, 7
    %v54 = vld [vmem:[%s53] sm:$0x1]
    %55 = vrot.lane.b32.xlu0 %v54, 56
    %v56 = vpop.permute.xlu0 %55
    %vm57 = vcmask 523712
    %58 = vst.msk [vmem:[#allocation0] sm:$0x1] %vm57, %v56
    %s59 = scalar_lea.vmem %s0, 6
    %v60 = vld [vmem:[%s59] sm:$0x1]
    %61 = vrot.lane.b32.xlu0 %v60, 48
    %v62 = vpop.permute.xlu0 %61
    %vm63 = vcmask 458112
    %64 = vst.msk [vmem:[#allocation0] sm:$0x1] %vm63, %v62
    %s65 = scalar_lea.vmem %s0, 5
    %v66 = vld [vmem:[%s65] sm:$0x1]
    %67 = vrot.lane.b32.xlu0 %v66, 40
    %v68 = vpop.permute.xlu0 %67
    %vm69 = vcmask 392512
    %70 = vst.msk [vmem:[#allocation0] sm:$0x1] %vm69, %v68
    %s71 = scalar_lea.vmem %s0, 4
    %v72 = vld [vmem:[%s71] sm:$0x1]
    %73 = vrot.lane.b32.xlu0 %v72, 32
    %v74 = vpop.permute.xlu0 %73
    %vm75 = vcmask 326912
    %76 = vst.msk [vmem:[#allocation0] sm:$0x1] %vm75, %v74
    %s77 = scalar_lea.vmem %s0, 3
    %v78 = vld [vmem:[%s77] sm:$0x1]
    %79 = vrot.lane.b32.xlu0 %v78, 24
    %v80 = vpop.permute.xlu0 %79
    %vm81 = vcmask 261312
    %82 = vst.msk [vmem:[#allocation0] sm:$0x1] %vm81, %v80
    %s83 = scalar_lea.vmem %s0, 2
    %v84 = vld [vmem:[%s83] sm:$0x1]
    %85 = vrot.lane.b32.xlu0 %v84, 16
    %v86 = vpop.permute.xlu0 %85
    %vm87 = vcmask 195712
    %88 = vst.msk [vmem:[#allocation0] sm:$0x1] %vm87, %v86
    %s89 = scalar_lea.vmem %s0, 1
    %v90 = vld [vmem:[%s89] sm:$0x1]
    %91 = vrot.lane.b32.xlu0 %v90, 8
    %v92 = vpop.permute.xlu0 %91
    %vm93 = vcmask 130112
    %94 = vst.msk [vmem:[#allocation0] sm:$0x1] %vm93, %v92
    %s96 = sshllo.u32 0, 1
    %v98 = vld [vmem:[#allocation0] sm:%s96]
    %s99 = sshllo.u32 0, 1
    %100 = vst [vmem:[%s1] sm:%s99] %v98

// kernel: preact_block_forward.3
$region0: #{preact_block_forward.3}
  #allocation0 [shape = 'u32[]', space=smem, size = 0x4, offset = 0x4, fixed_abs, tag = 'smem constant byte address 0x4 - core index']
  #allocation1 [shape = 'u32[144,128]{1,0:T(1,128)}', space=vmem, size = 0x12000, scoped, tag = 'internal scratch']
  %s0 = inlined_call_operand.vmem [shape: f32[32,64], index: 0, kind: input, shape index: {}]
  %s1 = inlined_call_operand.vmem [shape: f32[64,4], index: 1, kind: input, shape index: {}]
  %s2 = inlined_call_operand.vmem [shape: f32[1,4], index: 2, kind: output, shape index: {0}]
  %s3 = inlined_call_operand.vmem [shape: f32[1,4], index: 3, kind: output, shape index: {1}]
  %4 = xla_tuple %s2, %s3
  %s5 = sld [smem:[#allocation0]]
  $region30: #{preact_block_forward.3} parent=0
    _
  %s7 = ssub.s32 1, %s5
  %s8 = scalar_select 0, %s7, %s5
  // Predicated region
  $region2: #{preact_block_forward.3} parent=0 // pred_check
    _
  $region3: #{preact_block_forward.3} parent=0 // pred_check_branch
    %10 = sbr.rel (0) target = $region5
  $region4: #{preact_block_forward.3} parent=0 // pred_region
    _
  $region5: #{preact_block_forward.3} parent=0 // pred_fallthru
    _
  // Predicated region
  $region6: #{preact_block_forward.3} parent=0 // pred_check
    _
  $region7: #{preact_block_forward.3} parent=0 // pred_check_branch
    %12 = sbr.rel (0) target = $region9
  $region8: #{preact_block_forward.3} parent=0 // pred_region
    _
  $region9: #{preact_block_forward.3} parent=0 // pred_fallthru
    _
  %p13 = scmp.eq.s32.totalorder 0, 0
  // Predicated region
  $region10: #{preact_block_forward.3} parent=0 // pred_check
    %p14 = pneg %p13
  $region11: #{preact_block_forward.3} parent=0 // pred_check_branch
    %16 = sbr.rel (%p14) target = $region13
  $region12: #{preact_block_forward.3} parent=0 // pred_region
    %vm17 = vcmask 24576
    %18 = vst.msk [vmem:[%s2] sm:$0x1] %vm17, 0.0
    %19 = vst.msk [vmem:[%s3] sm:$0x1] %vm17, 0.0
  $region13: #{preact_block_forward.3} parent=0 // pred_fallthru
    _
  %v20 = vld [vmem:[%s0] sm:$0xff]
  %v21 = vld [vmem:[%s0 + $0x8] sm:$0xff]
  %v22 = vld [vmem:[%s0 + $0x10] sm:$0xff]
  %v23 = vld [vmem:[%s0 + $0x18] sm:$0xff]
  %vm24 = vcmask 523264
  %v25 = vsel %vm24, %v20, 0.0
  %v26 = vsel %vm24, %v21, 0.0
  %v27 = vadd.f32 %v25, %v26
  %v28 = vsel %vm24, %v22, 0.0
  %v29 = vadd.f32 %v27, %v28
  %v30 = vsel %vm24, %v23, 0.0
  %v31 = vadd.f32 %v29, %v30
  %v32 = vrot.slane %v31, 4
  %v33 = vadd.f32 %v31, %v32
  %v34 = vrot.slane %v33, 2
  %v35 = vadd.f32 %v33, %v34
  %v36 = vrot.slane %v35, 1
  %v37 = vadd.f32 %v35, %v36
  %v38 = vmul.f32 %v20, %v20
  %v39 = vmul.f32 %v21, %v21
  %v40 = vmul.f32 %v22, %v22
  %v41 = vmul.f32 %v23, %v23
  %v42 = vsel %vm24, %v38, 0.0
  %v43 = vsel %vm24, %v39, 0.0
  %v44 = vadd.f32 %v42, %v43
  %v45 = vsel %vm24, %v40, 0.0
  %v46 = vadd.f32 %v44, %v45
  %v47 = vsel %vm24, %v41, 0.0
  %v48 = vadd.f32 %v46, %v47
  %v49 = vrot.slane %v48, 4
  %v50 = vadd.f32 %v48, %v49
  %v51 = vrot.slane %v50, 2
  %v52 = vadd.f32 %v50, %v51
  %v53 = vrot.slane %v52, 1
  %v54 = vadd.f32 %v52, %v53
  %v55 = vld [vmem:[%s2] sm:$0x1]
  %v56 = vld [vmem:[%s1] sm:$0xff]
  %v57 = vld [vmem:[%s1 + $0x8] sm:$0xff]
  %v58 = vld [vmem:[%s1 + $0x10] sm:$0xff]
  %v59 = vld [vmem:[%s1 + $0x18] sm:$0xff]
  %v60 = vld [vmem:[%s1 + $0x20] sm:$0xff]
  %v61 = vld [vmem:[%s1 + $0x28] sm:$0xff]
  %v62 = vld [vmem:[%s1 + $0x30] sm:$0xff]
  %v63 = vld [vmem:[%s1 + $0x38] sm:$0xff]
  %v65 = vsel %vm24, %v37, 0
  %67 = vmatprep.subr.mxu0 0.0
  %68 = vmatpush1.msra.mxu0 %v56
  %69 = vmatprep.subr.mxu0 0.0
  %70 = vmatpush1.msra.mxu0 %v57
  %71 = vmatprep.subr.mxu0 0.0
  %72 = vmatpush1.msra.mxu0 %v58
  %73 = vmatprep.subr.mxu0 0.0
  %74 = vmatpush1.msra.mxu0 %v59
  %75 = vmatprep.subr.mxu0 0.0
  %76 = vmatpush1.msra.mxu0 %v60
  %77 = vmatprep.subr.mxu0 0.0
  %78 = vmatpush1.msra.mxu0 %v61
  %79 = vmatprep.subr.mxu0 0.0
  %80 = vmatpush1.msra.mxu0 %v62
  %81 = vmatprep.subr.mxu0 0.0
  %82 = vmatpush1.msra.mxu0 %v63
  %83 = vmatprep.subr.mxu0 0.0
  %84 = vmatpush1.msra.mxu0 0.0
  %85 = vmatprep.subr.mxu0 0.0
  %86 = vmatpush1.msra.mxu0 0.0
  %87 = vmatprep.subr.mxu0 0.0
  %88 = vmatpush1.msra.mxu0 0.0
  %89 = vmatprep.subr.mxu0 0.0
  %90 = vmatpush1.msra.mxu0 0.0
  %91 = vmatprep.subr.mxu0 0.0
  %92 = vmatpush1.msra.mxu0 0.0
  %93 = vmatprep.subr.mxu0 0.0
  %94 = vmatpush1.msra.mxu0 0.0
  %95 = vmatprep.subr.mxu0 0.0
  %96 = vmatpush1.msra.mxu0 0.0
  %97 = vmatprep.subr.mxu0 0.0
  %98 = vmatpush1.msra.mxu0 0.0
  %99 = vmatprep.subr.mxu0 0.0
  %100 = vmatpush1.msra.mxu0 0.0
  %101 = vmatprep.subr.mxu0 0.0
  %102 = vmatpush1.msra.mxu0 0.0
  %103 = vmatprep.subr.mxu0 0.0
  %104 = vmatpush1.msra.mxu0 0.0
  %105 = vmatprep.subr.mxu0 0.0
  %106 = vmatpush1.msra.mxu0 0.0
  %107 = vmatprep.subr.mxu0 0.0
  %108 = vmatpush1.msra.mxu0 0.0
  %109 = vmatprep.subr.mxu0 0.0
  %110 = vmatpush1.msra.mxu0 0.0
  %111 = vmatprep.subr.mxu0 0.0
  %112 = vmatpush1.msra.mxu0 0.0
  %113 = vmatprep.subr.mxu0 0.0
  %114 = vmatpush1.msra.mxu0 0.0
  %115 = vmatprep.subr.mxu0 0.0
  %116 = vmatpush1.msra.mxu0 0.0
  %117 = vmatprep.subr.mxu0 0.0
  %118 = vmatpush1.msra.mxu0 0.0
  %119 = vmatprep.subr.mxu0 0.0
  %120 = vmatpush1.msra.mxu0 0.0
  %121 = vmatprep.subr.mxu0 0.0
  %122 = vmatpush1.msra.mxu0 0.0
  %123 = vmatprep.subr.mxu0 0.0
  %124 = vmatpush1.msra.mxu0 0.0
  %125 = vmatprep.subr.mxu0 0.0
  %126 = vmatpush1.msra.mxu0 0.0
  %127 = vmatprep.subr.mxu0 0.0
  %128 = vmatpush1.msra.mxu0 0.0
  %129 = vmatprep.subr.mxu0 0.0
  %130 = vmatpush1.msra.mxu0 0.0
  %131 = vmatprep.mubr.f32.mxu0 0.0
  %132 = vmatmul.mubr.f32.gmra.mrb[0].mxu0 %v65
  %v133 = vpop.f32.mrb[0].mxu0
  %v134 = vadd.f32 0.0, %v133
  %v135 = vpop.f32.mrb[0].mxu0
  %136 = vdwg.mxu0
  %v137 = vadd.f32 %v55, %v134
  %vm138 = vcmask 24576
  %139 = vst.msk [vmem:[%s2] sm:$0x1] %vm138, %v137
  %v140 = vld [vmem:[%s3] sm:$0x1]
  %v141 = vld [vmem:[%s1] sm:$0xff]
  %v142 = vld [vmem:[%s1 + $0x8] sm:$0xff]
  %v143 = vld [vmem:[%s1 + $0x10] sm:$0xff]
  %v144 = vld [vmem:[%s1 + $0x18] sm:$0xff]
  %v145 = vld [vmem:[%s1 + $0x20] sm:$0xff]
  %v146 = vld [vmem:[%s1 + $0x28] sm:$0xff]
  %v147 = vld [vmem:[%s1 + $0x30] sm:$0xff]
  %v148 = vld [vmem:[%s1 + $0x38] sm:$0xff]
  %v150 = vsel %vm24, %v54, 0
  %152 = vmatprep.subr.mxu0 0.0
  %153 = vmatpush1.msra.mxu0 %v141
  %154 = vmatprep.subr.mxu0 0.0
  %155 = vmatpush1.msra.mxu0 %v142
  %156 = vmatprep.subr.mxu0 0.0
  %157 = vmatpush1.msra.mxu0 %v143
  %158 = vmatprep.subr.mxu0 0.0
  %159 = vmatpush1.msra.mxu0 %v144
  %160 = vmatprep.subr.mxu0 0.0
  %161 = vmatpush1.msra.mxu0 %v145
  %162 = vmatprep.subr.mxu0 0.0
  %163 = vmatpush1.msra.mxu0 %v146
  %164 = vmatprep.subr.mxu0 0.0
  %165 = vmatpush1.msra.mxu0 %v147
  %166 = vmatprep.subr.mxu0 0.0
  %167 = vmatpush1.msra.mxu0 %v148
  %168 = vmatprep.subr.mxu0 0.0
  %169 = vmatpush1.msra.mxu0 0.0
  %170 = vmatprep.subr.mxu0 0.0
  %171 = vmatpush1.msra.mxu0 0.0
  %172 = vmatprep.subr.mxu0 0.0
  %173 = vmatpush1.msra.mxu0 0.0
  %174 = vmatprep.subr.mxu0 0.0
  %175 = vmatpush1.msra.mxu0 0.0
  %176 = vmatprep.subr.mxu0 0.0
  %177 = vmatpush1.msra.mxu0 0.0
  %178 = vmatprep.subr.mxu0 0.0
  %179 = vmatpush1.msra.mxu0 0.0
  %180 = vmatprep.subr.mxu0 0.0
  %181 = vmatpush1.msra.mxu0 0.0
  %182 = vmatprep.subr.mxu0 0.0
  %183 = vmatpush1.msra.mxu0 0.0
  %184 = vmatprep.subr.mxu0 0.0
  %185 = vmatpush1.msra.mxu0 0.0
  %186 = vmatprep.subr.mxu0 0.0
  %187 = vmatpush1.msra.mxu0 0.0
  %188 = vmatprep.subr.mxu0 0.0
  %189 = vmatpush1.msra.mxu0 0.0
  %190 = vmatprep.subr.mxu0 0.0
  %191 = vmatpush1.msra.mxu0 0.0
  %192 = vmatprep.subr.mxu0 0.0
  %193 = vmatpush1.msra.mxu0 0.0
  %194 = vmatprep.subr.mxu0 0.0
  %195 = vmatpush1.msra.mxu0 0.0
  %196 = vmatprep.subr.mxu0 0.0
  %197 = vmatpush1.msra.mxu0 0.0
  %198 = vmatprep.subr.mxu0 0.0
  %199 = vmatpush1.msra.mxu0 0.0
  %200 = vmatprep.subr.mxu0 0.0
  %201 = vmatpush1.msra.mxu0 0.0
  %202 = vmatprep.subr.mxu0 0.0
  %203 = vmatpush1.msra.mxu0 0.0
  %204 = vmatprep.subr.mxu0 0.0
  %205 = vmatpush1.msra.mxu0 0.0
  %206 = vmatprep.subr.mxu0 0.0
  %207 = vmatpush1.msra.mxu0 0.0
  %208 = vmatprep.subr.mxu0 0.0
  %209 = vmatpush1.msra.mxu0 0.0
  %210 = vmatprep.subr.mxu0 0.0
  %211 = vmatpush1.msra.mxu0 0.0
  %212 = vmatprep.subr.mxu0 0.0
  %213 = vmatpush1.msra.mxu0 0.0
  %214 = vmatprep.subr.mxu0 0.0
  %215 = vmatpush1.msra.mxu0 0.0
  %216 = vmatprep.mubr.f32.mxu0 0.0
  %217 = vmatmul.mubr.f32.gmra.mrb[0].mxu0 %v150
  %v218 = vpop.f32.mrb[0].mxu0
  %v219 = vadd.f32 0.0, %v218
  %v220 = vpop.f32.mrb[0].mxu0
  %221 = vdwg.mxu0
  %v222 = vadd.f32 %v140, %v219
  %223 = vst.msk [vmem:[%s3] sm:$0x1] %vm138, %v222
  // Predicated region
  $region14: #{preact_block_forward.3} parent=0 // pred_check
    _
  $region15: #{preact_block_forward.3} parent=0 // pred_check_branch
    %225 = sbr.rel (0) target = $region17
  $region16: #{preact_block_forward.3} parent=0 // pred_region
    _
  $region17: #{preact_block_forward.3} parent=0 // pred_fallthru
    _
  // Predicated region
  $region18: #{preact_block_forward.3} parent=0 // pred_check
    _
  $region19: #{preact_block_forward.3} parent=0 // pred_check_branch
    %227 = sbr.rel (0) target = $region21
  $region20: #{preact_block_forward.3} parent=0 // pred_region
    _
  $region21: #{preact_block_forward.3} parent=0 // pred_fallthru
    _
  // Predicated region
  $region22: #{preact_block_forward.3} parent=0 // pred_check
    _
  $region23: #{preact_block_forward.3} parent=0 // pred_check_branch
    %229 = sbr.rel (0) target = $region25
  $region24: #{preact_block_forward.3} parent=0 // pred_region
    _
  $region25: #{preact_block_forward.3} parent=0 // pred_fallthru
    _
  // Predicated region
  $region26: #{preact_block_forward.3} parent=0 // pred_check
    _
  $region27: #{preact_block_forward.3} parent=0 // pred_check_branch
    %231 = sbr.rel (0) target = $region29
  $region28: #{preact_block_forward.3} parent=0 // pred_region
    _
  $region29: #{preact_block_forward.3} parent=0 // pred_fallthru
    _

// kernel: preact_block_forward.5
$region0: #{preact_block_forward.5}
  #allocation0 [shape = 'u32[]', space=smem, size = 0x4, offset = 0x4, fixed_abs, tag = 'smem constant byte address 0x4 - core index']
  #allocation1 [shape = 'u32[144,128]{1,0:T(1,128)}', space=vmem, size = 0x12000, scoped, tag = 'internal scratch']
  #allocation2 [shape = 'f32[36,128]{1,0:T(8,128)}', space=vmem, size = 0x5000, scoped, tag = 'scratch operand']
  %s0 = inlined_call_operand.vmem [shape: f32[32,128], index: 0, kind: input, shape index: {}]
  %s1 = inlined_call_operand.vmem [shape: f32[1,128], index: 1, kind: input, shape index: {}]
  %s2 = inlined_call_operand.vmem [shape: f32[1,128], index: 2, kind: input, shape index: {}]
  %s3 = inlined_call_operand.vmem [shape: f32[3,128,128], index: 3, kind: input, shape index: {}]
  %s4 = inlined_call_operand.vmem [shape: f32[32,128], index: 4, kind: input, shape index: {}]
  %s5 = inlined_call_operand.vmem [shape: f32[32,128], index: 5, kind: output, shape index: {}]
  %s6 = sld [smem:[#allocation0]]
  $region30: #{preact_block_forward.5} parent=0
    _
  %s8 = ssub.s32 1, %s6
  %s9 = scalar_select 0, %s8, %s6
  // Predicated region
  $region2: #{preact_block_forward.5} parent=0 // pred_check
    _
  $region3: #{preact_block_forward.5} parent=0 // pred_check_branch
    %11 = sbr.rel (0) target = $region5
  $region4: #{preact_block_forward.5} parent=0 // pred_region
    _
  $region5: #{preact_block_forward.5} parent=0 // pred_fallthru
    _
  // Predicated region
  $region6: #{preact_block_forward.5} parent=0 // pred_check
    _
  $region7: #{preact_block_forward.5} parent=0 // pred_check_branch
    %13 = sbr.rel (0) target = $region9
  $region8: #{preact_block_forward.5} parent=0 // pred_region
    _
  $region9: #{preact_block_forward.5} parent=0 // pred_fallthru
    _
  // Predicated region
  $region10: #{preact_block_forward.5} parent=0 // pred_check
    _
  $region11: #{preact_block_forward.5} parent=0 // pred_check_branch
    %15 = sbr.rel (0) target = $region13
  $region12: #{preact_block_forward.5} parent=0 // pred_region
    _
  $region13: #{preact_block_forward.5} parent=0 // pred_fallthru
    _
  // Predicated region
  $region14: #{preact_block_forward.5} parent=0 // pred_check
    _
  $region15: #{preact_block_forward.5} parent=0 // pred_check_branch
    %17 = sbr.rel (0) target = $region17
  $region16: #{preact_block_forward.5} parent=0 // pred_region
    _
  $region17: #{preact_block_forward.5} parent=0 // pred_fallthru
    _
  // Predicated region
  $region18: #{preact_block_forward.5} parent=0 // pred_check
    _
  $region19: #{preact_block_forward.5} parent=0 // pred_check_branch
    %19 = sbr.rel (0) target = $region21
  $region20: #{preact_block_forward.5} parent=0 // pred_region
    _
  $region21: #{preact_block_forward.5} parent=0 // pred_fallthru
    _
  %20 = vst [vmem:[#allocation2] sm:$0x1] 0.0
  %21 = vst [vmem:[#allocation2 + $0x11] sm:$0x1] 0.0
  %22 = vst [vmem:[#allocation2 + $0x12] sm:$0x1] 0.0
  %23 = vst [vmem:[#allocation2 + $0x23] sm:$0x1] 0.0
  %v24 = vld [vmem:[%s0] sm:$0xff]
  %v25 = vld [vmem:[%s0 + $0x8] sm:$0xff]
  %v26 = vld [vmem:[%s0 + $0x10] sm:$0xff]
  %v27 = vld [vmem:[%s0 + $0x18] sm:$0xff]
  %v28 = vld [vmem:[%s1] sm:$0x1]
  %v30 = vlaneseq
  %v31 = vshrl.u32 %v30, 7
  %v32 = vsub.s32 0, %v31
  %v33 = vrot.slane %v28, %v32
  %v35 = vmul.f32 %v24, %v33
  %v36 = vmul.f32 %v25, %v33
  %v37 = vmul.f32 %v26, %v33
  %v38 = vmul.f32 %v27, %v33
  %v39 = vld [vmem:[%s2] sm:$0x1]
  %v41 = vlaneseq
  %v42 = vshrl.u32 %v41, 7
  %v43 = vsub.s32 0, %v42
  %v44 = vrot.slane %v39, %v43
  %v46 = vadd.f32 %v35, %v44
  %v47 = vadd.f32 %v36, %v44
  %v48 = vadd.f32 %v37, %v44
  %v49 = vadd.f32 %v38, %v44
  %v50 = vmax.f32 %v46, 0.0
  %v51 = vmax.f32 %v47, 0.0
  %v52 = vmax.f32 %v48, 0.0
  %v53 = vmax.f32 %v49, 0.0
  %54 = vst [vmem:[#allocation2 + $0x1] sm:$0xff] %v50
  %55 = vst [vmem:[#allocation2 + $0x9] sm:$0xff] %v51
  %56 = vst [vmem:[#allocation2 + $0x13] sm:$0xff] %v52
  %57 = vst [vmem:[#allocation2 + $0x1b] sm:$0xff] %v53
  %v58 = vld [vmem:[%s3] sm:$0xff]
  %v59 = vld [vmem:[%s3 + $0x8] sm:$0xff]
  %v60 = vld [vmem:[%s3 + $0x10] sm:$0xff]
  %v61 = vld [vmem:[%s3 + $0x18] sm:$0xff]
  %v62 = vld [vmem:[%s3 + $0x20] sm:$0xff]
  %v63 = vld [vmem:[%s3 + $0x28] sm:$0xff]
  %v64 = vld [vmem:[%s3 + $0x30] sm:$0xff]
  %v65 = vld [vmem:[%s3 + $0x38] sm:$0xff]
  %v66 = vld [vmem:[%s3 + $0x40] sm:$0xff]
  %v67 = vld [vmem:[%s3 + $0x48] sm:$0xff]
  %v68 = vld [vmem:[%s3 + $0x50] sm:$0xff]
  %v69 = vld [vmem:[%s3 + $0x58] sm:$0xff]
  %v70 = vld [vmem:[%s3 + $0x60] sm:$0xff]
  %v71 = vld [vmem:[%s3 + $0x68] sm:$0xff]
  %v72 = vld [vmem:[%s3 + $0x70] sm:$0xff]
  %v73 = vld [vmem:[%s3 + $0x78] sm:$0xff]
  %s74 = scalar_lea.vmem %s3, 128
  %v75 = vld [vmem:[%s74] sm:$0xff]
  %v76 = vld [vmem:[%s74 + $0x8] sm:$0xff]
  %v77 = vld [vmem:[%s74 + $0x10] sm:$0xff]
  %v78 = vld [vmem:[%s74 + $0x18] sm:$0xff]
  %v79 = vld [vmem:[%s74 + $0x20] sm:$0xff]
  %v80 = vld [vmem:[%s74 + $0x28] sm:$0xff]
  %v81 = vld [vmem:[%s74 + $0x30] sm:$0xff]
  %v82 = vld [vmem:[%s74 + $0x38] sm:$0xff]
  %v83 = vld [vmem:[%s74 + $0x40] sm:$0xff]
  %v84 = vld [vmem:[%s74 + $0x48] sm:$0xff]
  %v85 = vld [vmem:[%s74 + $0x50] sm:$0xff]
  %v86 = vld [vmem:[%s74 + $0x58] sm:$0xff]
  %v87 = vld [vmem:[%s74 + $0x60] sm:$0xff]
  %v88 = vld [vmem:[%s74 + $0x68] sm:$0xff]
  %v89 = vld [vmem:[%s74 + $0x70] sm:$0xff]
  %v90 = vld [vmem:[%s74 + $0x78] sm:$0xff]
  %s91 = scalar_lea.vmem %s3, 256
  %v92 = vld [vmem:[%s91] sm:$0xff]
  %v93 = vld [vmem:[%s91 + $0x8] sm:$0xff]
  %v94 = vld [vmem:[%s91 + $0x10] sm:$0xff]
  %v95 = vld [vmem:[%s91 + $0x18] sm:$0xff]
  %v96 = vld [vmem:[%s91 + $0x20] sm:$0xff]
  %v97 = vld [vmem:[%s91 + $0x28] sm:$0xff]
  %v98 = vld [vmem:[%s91 + $0x30] sm:$0xff]
  %v99 = vld [vmem:[%s91 + $0x38] sm:$0xff]
  %v100 = vld [vmem:[%s91 + $0x40] sm:$0xff]
  %v101 = vld [vmem:[%s91 + $0x48] sm:$0xff]
  %v102 = vld [vmem:[%s91 + $0x50] sm:$0xff]
  %v103 = vld [vmem:[%s91 + $0x58] sm:$0xff]
  %v104 = vld [vmem:[%s91 + $0x60] sm:$0xff]
  %v105 = vld [vmem:[%s91 + $0x68] sm:$0xff]
  %v106 = vld [vmem:[%s91 + $0x70] sm:$0xff]
  %v107 = vld [vmem:[%s91 + $0x78] sm:$0xff]
  %v108 = vld [vmem:[%s4] sm:$0xff]
  %v109 = vld [vmem:[%s4 + $0x8] sm:$0xff]
  %v110 = vld [vmem:[%s4 + $0x10] sm:$0xff]
  %v111 = vld [vmem:[%s4 + $0x18] sm:$0xff]
  %112 = vmatprep.subr.mxu0 0.0
  %113 = vmatpush1.msra.mxu0 %v75
  %114 = vmatprep.subr.mxu0 0.0
  %115 = vmatpush1.msra.mxu0 %v76
  %116 = vmatprep.subr.mxu0 0.0
  %117 = vmatpush1.msra.mxu0 %v77
  %118 = vmatprep.subr.mxu0 0.0
  %119 = vmatpush1.msra.mxu0 %v78
  %120 = vmatprep.subr.mxu0 0.0
  %121 = vmatpush1.msra.mxu0 %v79
  %122 = vmatprep.subr.mxu0 0.0
  %123 = vmatpush1.msra.mxu0 %v80
  %124 = vmatprep.subr.mxu0 0.0
  %125 = vmatpush1.msra.mxu0 %v81
  %126 = vmatprep.subr.mxu0 0.0
  %127 = vmatpush1.msra.mxu0 %v82
  %128 = vmatprep.subr.mxu0 0.0
  %129 = vmatpush1.msra.mxu0 %v83
  %130 = vmatprep.subr.mxu0 0.0
  %131 = vmatpush1.msra.mxu0 %v84
  %132 = vmatprep.subr.mxu0 0.0
  %133 = vmatpush1.msra.mxu0 %v85
  %134 = vmatprep.subr.mxu0 0.0
  %135 = vmatpush1.msra.mxu0 %v86
  %136 = vmatprep.subr.mxu0 0.0
  %137 = vmatpush1.msra.mxu0 %v87
  %138 = vmatprep.subr.mxu0 0.0
  %139 = vmatpush1.msra.mxu0 %v88
  %140 = vmatprep.subr.mxu0 0.0
  %141 = vmatpush1.msra.mxu0 %v89
  %142 = vmatprep.subr.mxu0 0.0
  %143 = vmatpush1.msra.mxu0 %v90
  %144 = vmatprep.subr.mxu0 0.0
  %145 = vmatpush1.msra.mxu0 0.0
  %146 = vmatprep.subr.mxu0 0.0
  %147 = vmatpush1.msra.mxu0 0.0
  %148 = vmatprep.subr.mxu0 0.0
  %149 = vmatpush1.msra.mxu0 0.0
  %150 = vmatprep.subr.mxu0 0.0
  %151 = vmatpush1.msra.mxu0 0.0
  %152 = vmatprep.subr.mxu0 0.0
  %153 = vmatpush1.msra.mxu0 0.0
  %154 = vmatprep.subr.mxu0 0.0
  %155 = vmatpush1.msra.mxu0 0.0
  %156 = vmatprep.subr.mxu0 0.0
  %157 = vmatpush1.msra.mxu0 0.0
  %158 = vmatprep.subr.mxu0 0.0
  %159 = vmatpush1.msra.mxu0 0.0
  %160 = vmatprep.subr.mxu0 0.0
  %161 = vmatpush1.msra.mxu0 0.0
  %162 = vmatprep.subr.mxu0 0.0
  %163 = vmatpush1.msra.mxu0 0.0
  %164 = vmatprep.subr.mxu0 0.0
  %165 = vmatpush1.msra.mxu0 0.0
  %166 = vmatprep.subr.mxu0 0.0
  %167 = vmatpush1.msra.mxu0 0.0
  %168 = vmatprep.subr.mxu0 0.0
  %169 = vmatpush1.msra.mxu0 0.0
  %170 = vmatprep.subr.mxu0 0.0
  %171 = vmatpush1.msra.mxu0 0.0
  %172 = vmatprep.subr.mxu0 0.0
  %173 = vmatpush1.msra.mxu0 0.0
  %174 = vmatprep.subr.mxu0 0.0
  %175 = vmatpush1.msra.mxu0 0.0
  %176 = vmatprep.mubr.f32.mxu0 0.0
  %177 = vmatmul.mubr.f32.gmra.mrb[0].mxu0 %v50
  %v178 = vpop.f32.mrb[0].mxu0
  %v179 = vadd.f32 %v108, %v178
  %v180 = vpop.f32.mrb[0].mxu0
  %181 = vmatprep.mubr.f32.mxu0 0.0
  %182 = vmatmul.mubr.f32.gmra.mrb[0].mxu0 %v51
  %v183 = vpop.f32.mrb[0].mxu0
  %v184 = vadd.f32 %v109, %v183
  %v185 = vpop.f32.mrb[0].mxu0
  %186 = vmatprep.mubr.f32.mxu0 0.0
  %187 = vmatmul.mubr.f32.gmra.mrb[0].mxu0 %v52
  %v188 = vpop.f32.mrb[0].mxu0
  %v189 = vadd.f32 %v110, %v188
  %v190 = vpop.f32.mrb[0].mxu0
  %191 = vmatprep.mubr.f32.mxu0 0.0
  %192 = vmatmul.mubr.f32.gmra.mrb[0].mxu0 %v53
  %v193 = vpop.f32.mrb[0].mxu0
  %v194 = vadd.f32 %v111, %v193
  %v195 = vpop.f32.mrb[0].mxu0
  %196 = vdwg.mxu0
  %v197 = vld [vmem:[#allocation2] sm:$0xff]
  %v198 = vld [vmem:[#allocation2 + $0x8] sm:$0xff]
  %v199 = vld [vmem:[#allocation2 + $0x10] sm:$0xff]
  %v200 = vld [vmem:[#allocation2 + $0x18] sm:$0xff]
  %v201 = vld [vmem:[#allocation2 + $0x20] sm:$0x3]
  %v202 = vld [vmem:[#allocation2 + $0x2] sm:$0xff]
  %v203 = vld [vmem:[#allocation2 + $0xa] sm:$0xff]
  %v204 = vld [vmem:[#allocation2 + $0x12] sm:$0xff]
  %v205 = vld [vmem:[#allocation2 + $0x1a] sm:$0xff]
  %v206 = vld [vmem:[#allocation2 + $0x22] sm:$0x3]
  %207 = vmatprep.subr.mxu0 0.0
  %208 = vmatpush1.msra.mxu0 %v92
  %209 = vmatprep.subr.mxu0 0.0
  %210 = vmatpush1.msra.mxu0 %v93
  %211 = vmatprep.subr.mxu0 0.0
  %212 = vmatpush1.msra.mxu0 %v94
  %213 = vmatprep.subr.mxu0 0.0
  %214 = vmatpush1.msra.mxu0 %v95
  %215 = vmatprep.subr.mxu0 0.0
  %216 = vmatpush1.msra.mxu0 %v96
  %217 = vmatprep.subr.mxu0 0.0
  %218 = vmatpush1.msra.mxu0 %v97
  %219 = vmatprep.subr.mxu0 0.0
  %220 = vmatpush1.msra.mxu0 %v98
  %221 = vmatprep.subr.mxu0 0.0
  %222 = vmatpush1.msra.mxu0 %v99
  %223 = vmatprep.subr.mxu0 0.0
  %224 = vmatpush1.msra.mxu0 %v100
  %225 = vmatprep.subr.mxu0 0.0
  %226 = vmatpush1.msra.mxu0 %v101
  %227 = vmatprep.subr.mxu0 0.0
  %228 = vmatpush1.msra.mxu0 %v102
  %229 = vmatprep.subr.mxu0 0.0
  %230 = vmatpush1.msra.mxu0 %v103
  %231 = vmatprep.subr.mxu0 0.0
  %232 = vmatpush1.msra.mxu0 %v104
  %233 = vmatprep.subr.mxu0 0.0
  %234 = vmatpush1.msra.mxu0 %v105
  %235 = vmatprep.subr.mxu0 0.0
  %236 = vmatpush1.msra.mxu0 %v106
  %237 = vmatprep.subr.mxu0 0.0
  %238 = vmatpush1.msra.mxu0 %v107
  %239 = vmatprep.subr.mxu0 0.0
  %240 = vmatpush1.msra.mxu0 0.0
  %241 = vmatprep.subr.mxu0 0.0
  %242 = vmatpush1.msra.mxu0 0.0
  %243 = vmatprep.subr.mxu0 0.0
  %244 = vmatpush1.msra.mxu0 0.0
  %245 = vmatprep.subr.mxu0 0.0
  %246 = vmatpush1.msra.mxu0 0.0
  %247 = vmatprep.subr.mxu0 0.0
  %248 = vmatpush1.msra.mxu0 0.0
  %249 = vmatprep.subr.mxu0 0.0
  %250 = vmatpush1.msra.mxu0 0.0
  %251 = vmatprep.subr.mxu0 0.0
  %252 = vmatpush1.msra.mxu0 0.0
  %253 = vmatprep.subr.mxu0 0.0
  %254 = vmatpush1.msra.mxu0 0.0
  %255 = vmatprep.subr.mxu0 0.0
  %256 = vmatpush1.msra.mxu0 0.0
  %257 = vmatprep.subr.mxu0 0.0
  %258 = vmatpush1.msra.mxu0 0.0
  %259 = vmatprep.subr.mxu0 0.0
  %260 = vmatpush1.msra.mxu0 0.0
  %261 = vmatprep.subr.mxu0 0.0
  %262 = vmatpush1.msra.mxu0 0.0
  %263 = vmatprep.subr.mxu0 0.0
  %264 = vmatpush1.msra.mxu0 0.0
  %265 = vmatprep.subr.mxu0 0.0
  %266 = vmatpush1.msra.mxu0 0.0
  %267 = vmatprep.subr.mxu0 0.0
  %268 = vmatpush1.msra.mxu0 0.0
  %269 = vmatprep.subr.mxu0 0.0
  %270 = vmatpush1.msra.mxu0 0.0
  %271 = vmatprep.mubr.f32.mxu0 0.0
  %272 = vmatmul.mubr.f32.gmra.mrb[0].mxu0 %v202
  %v273 = vpop.f32.mrb[0].mxu0
  %v274 = vadd.f32 0.0, %v273
  %v275 = vpop.f32.mrb[0].mxu0
  %276 = vmatprep.mubr.f32.mxu0 0.0
  %277 = vmatmul.mubr.f32.gmra.mrb[0].mxu0 %v203
  %v278 = vpop.f32.mrb[0].mxu0
  %v279 = vadd.f32 0.0, %v278
  %v280 = vpop.f32.mrb[0].mxu0
  %281 = vmatprep.mubr.f32.mxu0 0.0
  %282 = vmatmul.mubr.f32.gmra.mrb[0].mxu0 %v204
  %v283 = vpop.f32.mrb[0].mxu0
  %v284 = vadd.f32 0.0, %v283
  %v285 = vpop.f32.mrb[0].mxu0
  %286 = vmatprep.mubr.f32.mxu0 0.0
  %287 = vmatmul.mubr.f32.gmra.mrb[0].mxu0 %v205
  %v288 = vpop.f32.mrb[0].mxu0
  %v289 = vadd.f32 0.0, %v288
  %v290 = vpop.f32.mrb[0].mxu0
  %291 = vmatprep.mubr.f32.mxu0 0.0
  %292 = vmatmul.mubr.f32.gmra.mrb[0].mxu0 %v206
  %v293 = vpop.f32.mrb[0].mxu0
  %v294 = vadd.f32 0.0, %v293
  %v295 = vpop.f32.mrb[0].mxu0
  %296 = vdwg.mxu0
  %297 = vmatprep.subr.mxu0 0.0
  %298 = vmatpush1.msra.mxu0 %v58
  %299 = vmatprep.subr.mxu0 0.0
  %300 = vmatpush1.msra.mxu0 %v59
  %301 = vmatprep.subr.mxu0 0.0
  %302 = vmatpush1.msra.mxu0 %v60
  %303 = vmatprep.subr.mxu0 0.0
  %304 = vmatpush1.msra.mxu0 %v61
  %305 = vmatprep.subr.mxu0 0.0
  %306 = vmatpush1.msra.mxu0 %v62
  %307 = vmatprep.subr.mxu0 0.0
  %308 = vmatpush1.msra.mxu0 %v63
  %309 = vmatprep.subr.mxu0 0.0
  %310 = vmatpush1.msra.mxu0 %v64
  %311 = vmatprep.subr.mxu0 0.0
  %312 = vmatpush1.msra.mxu0 %v65
  %313 = vmatprep.subr.mxu0 0.0
  %314 = vmatpush1.msra.mxu0 %v66
  %315 = vmatprep.subr.mxu0 0.0
  %316 = vmatpush1.msra.mxu0 %v67
  %317 = vmatprep.subr.mxu0 0.0
  %318 = vmatpush1.msra.mxu0 %v68
  %319 = vmatprep.subr.mxu0 0.0
  %320 = vmatpush1.msra.mxu0 %v69
  %321 = vmatprep.subr.mxu0 0.0
  %322 = vmatpush1.msra.mxu0 %v70
  %323 = vmatprep.subr.mxu0 0.0
  %324 = vmatpush1.msra.mxu0 %v71
  %325 = vmatprep.subr.mxu0 0.0
  %326 = vmatpush1.msra.mxu0 %v72
  %327 = vmatprep.subr.mxu0 0.0
  %328 = vmatpush1.msra.mxu0 %v73
  %329 = vmatprep.subr.mxu0 0.0
  %330 = vmatpush1.msra.mxu0 0.0
  %331 = vmatprep.subr.mxu0 0.0
  %332 = vmatpush1.msra.mxu0 0.0
  %333 = vmatprep.subr.mxu0 0.0
  %334 = vmatpush1.msra.mxu0 0.0
  %335 = vmatprep.subr.mxu0 0.0
  %336 = vmatpush1.msra.mxu0 0.0
  %337 = vmatprep.subr.mxu0 0.0
  %338 = vmatpush1.msra.mxu0 0.0
  %339 = vmatprep.subr.mxu0 0.0
  %340 = vmatpush1.msra.mxu0 0.0
  %341 = vmatprep.subr.mxu0 0.0
  %342 = vmatpush1.msra.mxu0 0.0
  %343 = vmatprep.subr.mxu0 0.0
  %344 = vmatpush1.msra.mxu0 0.0
  %345 = vmatprep.subr.mxu0 0.0
  %346 = vmatpush1.msra.mxu0 0.0
  %347 = vmatprep.subr.mxu0 0.0
  %348 = vmatpush1.msra.mxu0 0.0
  %349 = vmatprep.subr.mxu0 0.0
  %350 = vmatpush1.msra.mxu0 0.0
  %351 = vmatprep.subr.mxu0 0.0
  %352 = vmatpush1.msra.mxu0 0.0
  %353 = vmatprep.subr.mxu0 0.0
  %354 = vmatpush1.msra.mxu0 0.0
  %355 = vmatprep.subr.mxu0 0.0
  %356 = vmatpush1.msra.mxu0 0.0
  %357 = vmatprep.subr.mxu0 0.0
  %358 = vmatpush1.msra.mxu0 0.0
  %359 = vmatprep.subr.mxu0 0.0
  %360 = vmatpush1.msra.mxu0 0.0
  %361 = vmatprep.mubr.f32.mxu0 0.0
  %362 = vmatmul.mubr.f32.gmra.mrb[0].mxu0 %v197
  %v363 = vpop.f32.mrb[0].mxu0
  %v364 = vadd.f32 %v274, %v363
  %v365 = vpop.f32.mrb[0].mxu0
  %366 = vmatprep.mubr.f32.mxu0 0.0
  %367 = vmatmul.mubr.f32.gmra.mrb[0].mxu0 %v198
  %v368 = vpop.f32.mrb[0].mxu0
  %v369 = vadd.f32 %v279, %v368
  %v370 = vpop.f32.mrb[0].mxu0
  %371 = vmatprep.mubr.f32.mxu0 0.0
  %372 = vmatmul.mubr.f32.gmra.mrb[0].mxu0 %v199
  %v373 = vpop.f32.mrb[0].mxu0
  %v374 = vadd.f32 %v284, %v373
  %v375 = vpop.f32.mrb[0].mxu0
  %376 = vmatprep.mubr.f32.mxu0 0.0
  %377 = vmatmul.mubr.f32.gmra.mrb[0].mxu0 %v200
  %v378 = vpop.f32.mrb[0].mxu0
  %v379 = vadd.f32 %v289, %v378
  %v380 = vpop.f32.mrb[0].mxu0
  %381 = vmatprep.mubr.f32.mxu0 0.0
  %382 = vmatmul.mubr.f32.gmra.mrb[0].mxu0 %v201
  %v383 = vpop.f32.mrb[0].mxu0
  %v384 = vadd.f32 %v294, %v383
  %v385 = vpop.f32.mrb[0].mxu0
  %386 = vdwg.mxu0
  %v387 = vadd.f32 %v179, %v364
  %v388 = vadd.f32 %v184, %v369
  %389 = vst [vmem:[%s5] sm:$0xff] %v387
  %390 = vst [vmem:[%s5 + $0x8] sm:$0xff] %v388
  %vm394 = vcmask 1045504
  %v395 = vrot.slane %v374, 2
  %v396 = vrot.slane %v379, 2
  %v397 = vsel %vm394, %v395, %v396
  %v398 = vrot.slane %v384, 2
  %v399 = vsel %vm394, %v396, %v398
  %v402 = vadd.f32 %v189, %v397
  %v403 = vadd.f32 %v194, %v399
  %404 = vst [vmem:[%s5 + $0x10] sm:$0xff] %v402
  %405 = vst [vmem:[%s5 + $0x18] sm:$0xff] %v403
  // Predicated region
  $region22: #{preact_block_forward.5} parent=0 // pred_check
    _
  $region23: #{preact_block_forward.5} parent=0 // pred_check_branch
    %407 = sbr.rel (0) target = $region25
  $region24: #{preact_block_forward.5} parent=0 // pred_region
    _
  $region25: #{preact_block_forward.5} parent=0 // pred_fallthru
    _
  // Predicated region
  $region26: #{preact_block_forward.5} parent=0 // pred_check
    _
  $region27: #{preact_block_forward.5} parent=0 // pred_check_branch
    %409 = sbr.rel (0) target = $region29
  $region28: #{preact_block_forward.5} parent=0 // pred_region
    _
  $region29: #{preact_block_forward.5} parent=0 // pred_fallthru
    _

// kernel: preact_block_forward.4
$region0: #{preact_block_forward.4}
  #allocation0 [shape = 'u32[]', space=smem, size = 0x4, offset = 0x4, fixed_abs, tag = 'smem constant byte address 0x4 - core index']
  #allocation1 [shape = 'u32[144,128]{1,0:T(1,128)}', space=vmem, size = 0x12000, scoped, tag = 'internal scratch']
  #allocation2 [shape = 'f32[36,64]{1,0:T(8,128)}', space=vmem, size = 0x5000, scoped, tag = 'scratch operand']
  %s0 = inlined_call_operand.vmem [shape: f32[32,64], index: 0, kind: input, shape index: {}]
  %s1 = inlined_call_operand.vmem [shape: f32[1,64], index: 1, kind: input, shape index: {}]
  %s2 = inlined_call_operand.vmem [shape: f32[1,64], index: 2, kind: input, shape index: {}]
  %s3 = inlined_call_operand.vmem [shape: f32[3,64,128], index: 3, kind: input, shape index: {}]
  %s4 = inlined_call_operand.vmem [shape: f32[128,8], index: 4, kind: input, shape index: {}]
  %s5 = inlined_call_operand.vmem [shape: f32[64,128], index: 5, kind: input, shape index: {}]
  %s6 = inlined_call_operand.vmem [shape: f32[32,128], index: 6, kind: output, shape index: {0}]
  %s7 = inlined_call_operand.vmem [shape: f32[1,8], index: 7, kind: output, shape index: {1}]
  %s8 = inlined_call_operand.vmem [shape: f32[1,8], index: 8, kind: output, shape index: {2}]
  %s9 = inlined_call_operand.vmem [shape: f32[32,128], index: 9, kind: output, shape index: {3}]
  %10 = xla_tuple %s6, %s7, %s8, %s9
  %s11 = sld [smem:[#allocation0]]
  $region62: #{preact_block_forward.4} parent=0
    _
  %s13 = ssub.s32 1, %s11
  %s14 = scalar_select 0, %s13, %s11
  // Predicated region
  $region2: #{preact_block_forward.4} parent=0 // pred_check
    _
  $region3: #{preact_block_forward.4} parent=0 // pred_check_branch
    %16 = sbr.rel (0) target = $region5
  $region4: #{preact_block_forward.4} parent=0 // pred_region
    _
  $region5: #{preact_block_forward.4} parent=0 // pred_fallthru
    _
  // Predicated region
  $region6: #{preact_block_forward.4} parent=0 // pred_check
    _
  $region7: #{preact_block_forward.4} parent=0 // pred_check_branch
    %18 = sbr.rel (0) target = $region9
  $region8: #{preact_block_forward.4} parent=0 // pred_region
    _
  $region9: #{preact_block_forward.4} parent=0 // pred_fallthru
    _
  // Predicated region
  $region10: #{preact_block_forward.4} parent=0 // pred_check
    _
  $region11: #{preact_block_forward.4} parent=0 // pred_check_branch
    %20 = sbr.rel (0) target = $region13
  $region12: #{preact_block_forward.4} parent=0 // pred_region
    _
  $region13: #{preact_block_forward.4} parent=0 // pred_fallthru
    _
  // Predicated region
  $region14: #{preact_block_forward.4} parent=0 // pred_check
    _
  $region15: #{preact_block_forward.4} parent=0 // pred_check_branch
    %22 = sbr.rel (0) target = $region17
  $region16: #{preact_block_forward.4} parent=0 // pred_region
    _
  $region17: #{preact_block_forward.4} parent=0 // pred_fallthru
    _
  // Predicated region
  $region18: #{preact_block_forward.4} parent=0 // pred_check
    _
  $region19: #{preact_block_forward.4} parent=0 // pred_check_branch
    %24 = sbr.rel (0) target = $region21
  $region20: #{preact_block_forward.4} parent=0 // pred_region
    _
  $region21: #{preact_block_forward.4} parent=0 // pred_fallthru
    _
  // Predicated region
  $region22: #{preact_block_forward.4} parent=0 // pred_check
    _
  $region23: #{preact_block_forward.4} parent=0 // pred_check_branch
    %26 = sbr.rel (0) target = $region25
  $region24: #{preact_block_forward.4} parent=0 // pred_region
    _
  $region25: #{preact_block_forward.4} parent=0 // pred_fallthru
    _
  %p27 = scmp.eq.s32.totalorder 0, 0
  // Predicated region
  $region26: #{preact_block_forward.4} parent=0 // pred_check
    %p28 = pneg %p27
  $region27: #{preact_block_forward.4} parent=0 // pred_check_branch
    %30 = sbr.rel (%p28) target = $region29
  $region28: #{preact_block_forward.4} parent=0 // pred_region
    %vm31 = vcmask 57344
    %32 = vst.msk [vmem:[%s7] sm:$0x1] %vm31, 0.0
    %33 = vst.msk [vmem:[%s8] sm:$0x1] %vm31, 0.0
  $region29: #{preact_block_forward.4} parent=0 // pred_fallthru
    _
  %vm34 = vcmask 516096
  %35 = vst.msk [vmem:[#allocation2] sm:$0x1] %vm34, 0.0
  %36 = vst.msk [vmem:[#allocation2 + $0x11] sm:$0x1] %vm34, 0.0
  %37 = vst.msk [vmem:[#allocation2 + $0x12] sm:$0x1] %vm34, 0.0
  %38 = vst.msk [vmem:[#allocation2 + $0x23] sm:$0x1] %vm34, 0.0
  %v39 = vld [vmem:[%s0] sm:$0xff]
  %v40 = vld [vmem:[%s0 + $0x8] sm:$0xff]
  %v41 = vld [vmem:[%s0 + $0x10] sm:$0xff]
  %v42 = vld [vmem:[%s0 + $0x18] sm:$0xff]
  %v43 = vld [vmem:[%s1] sm:$0x1]
  %v45 = vlaneseq
  %v46 = vshrl.u32 %v45, 7
  %v47 = vsub.s32 0, %v46
  %v48 = vrot.slane %v43, %v47
  %v50 = vmul.f32 %v39, %v48
  %v51 = vmul.f32 %v40, %v48
  %v52 = vmul.f32 %v41, %v48
  %v53 = vmul.f32 %v42, %v48
  %v54 = vld [vmem:[%s2] sm:$0x1]
  %v56 = vlaneseq
  %v57 = vshrl.u32 %v56, 7
  %v58 = vsub.s32 0, %v57
  %v59 = vrot.slane %v54, %v58
  %v61 = vadd.f32 %v50, %v59
  %v62 = vadd.f32 %v51, %v59
  %v63 = vadd.f32 %v52, %v59
  %v64 = vadd.f32 %v53, %v59
  %v65 = vmax.f32 %v61, 0.0
  %v66 = vmax.f32 %v62, 0.0
  %v67 = vmax.f32 %v63, 0.0
  %v68 = vmax.f32 %v64, 0.0
  %vm69 = vcmask 523264
  %70 = vst.msk [vmem:[#allocation2 + $0x1] sm:$0xff] %vm69, %v65
  %71 = vst.msk [vmem:[#allocation2 + $0x9] sm:$0xff] %vm69, %v66
  %72 = vst.msk [vmem:[#allocation2 + $0x13] sm:$0xff] %vm69, %v67
  %73 = vst.msk [vmem:[#allocation2 + $0x1b] sm:$0xff] %vm69, %v68
  %v74 = vld [vmem:[%s3] sm:$0xff]
  %v75 = vld [vmem:[%s3 + $0x8] sm:$0xff]
  %v76 = vld [vmem:[%s3 + $0x10] sm:$0xff]
  %v77 = vld [vmem:[%s3 + $0x18] sm:$0xff]
  %v78 = vld [vmem:[%s3 + $0x20] sm:$0xff]
  %v79 = vld [vmem:[%s3 + $0x28] sm:$0xff]
  %v80 = vld [vmem:[%s3 + $0x30] sm:$0xff]
  %v81 = vld [vmem:[%s3 + $0x38] sm:$0xff]
  %s82 = scalar_lea.vmem %s3, 64
  %v83 = vld [vmem:[%s82] sm:$0xff]
  %v84 = vld [vmem:[%s82 + $0x8] sm:$0xff]
  %v85 = vld [vmem:[%s82 + $0x10] sm:$0xff]
  %v86 = vld [vmem:[%s82 + $0x18] sm:$0xff]
  %v87 = vld [vmem:[%s82 + $0x20] sm:$0xff]
  %v88 = vld [vmem:[%s82 + $0x28] sm:$0xff]
  %v89 = vld [vmem:[%s82 + $0x30] sm:$0xff]
  %v90 = vld [vmem:[%s82 + $0x38] sm:$0xff]
  %s91 = scalar_lea.vmem %s3, 128
  %v92 = vld [vmem:[%s91] sm:$0xff]
  %v93 = vld [vmem:[%s91 + $0x8] sm:$0xff]
  %v94 = vld [vmem:[%s91 + $0x10] sm:$0xff]
  %v95 = vld [vmem:[%s91 + $0x18] sm:$0xff]
  %v96 = vld [vmem:[%s91 + $0x20] sm:$0xff]
  %v97 = vld [vmem:[%s91 + $0x28] sm:$0xff]
  %v98 = vld [vmem:[%s91 + $0x30] sm:$0xff]
  %v99 = vld [vmem:[%s91 + $0x38] sm:$0xff]
  %v101 = vsel %vm69, %v65, 0
  %v104 = vsel %vm69, %v66, 0
  %v107 = vsel %vm69, %v67, 0
  %v110 = vsel %vm69, %v68, 0
  %112 = vmatprep.subr.mxu0 0.0
  %113 = vmatpush1.msra.mxu0 %v83
  %114 = vmatprep.subr.mxu0 0.0
  %115 = vmatpush1.msra.mxu0 %v84
  %116 = vmatprep.subr.mxu0 0.0
  %117 = vmatpush1.msra.mxu0 %v85
  %118 = vmatprep.subr.mxu0 0.0
  %119 = vmatpush1.msra.mxu0 %v86
  %120 = vmatprep.subr.mxu0 0.0
  %121 = vmatpush1.msra.mxu0 %v87
  %122 = vmatprep.subr.mxu0 0.0
  %123 = vmatpush1.msra.mxu0 %v88
  %124 = vmatprep.subr.mxu0 0.0
  %125 = vmatpush1.msra.mxu0 %v89
  %126 = vmatprep.subr.mxu0 0.0
  %127 = vmatpush1.msra.mxu0 %v90
  %128 = vmatprep.subr.mxu0 0.0
  %129 = vmatpush1.msra.mxu0 0.0
  %130 = vmatprep.subr.mxu0 0.0
  %131 = vmatpush1.msra.mxu0 0.0
  %132 = vmatprep.subr.mxu0 0.0
  %133 = vmatpush1.msra.mxu0 0.0
  %134 = vmatprep.subr.mxu0 0.0
  %135 = vmatpush1.msra.mxu0 0.0
  %136 = vmatprep.subr.mxu0 0.0
  %137 = vmatpush1.msra.mxu0 0.0
  %138 = vmatprep.subr.mxu0 0.0
  %139 = vmatpush1.msra.mxu0 0.0
  %140 = vmatprep.subr.mxu0 0.0
  %141 = vmatpush1.msra.mxu0 0.0
  %142 = vmatprep.subr.mxu0 0.0
  %143 = vmatpush1.msra.mxu0 0.0
  %144 = vmatprep.subr.mxu0 0.0
  %145 = vmatpush1.msra.mxu0 0.0
  %146 = vmatprep.subr.mxu0 0.0
  %147 = vmatpush1.msra.mxu0 0.0
  %148 = vmatprep.subr.mxu0 0.0
  %149 = vmatpush1.msra.mxu0 0.0
  %150 = vmatprep.subr.mxu0 0.0
  %151 = vmatpush1.msra.mxu0 0.0
  %152 = vmatprep.subr.mxu0 0.0
  %153 = vmatpush1.msra.mxu0 0.0
  %154 = vmatprep.subr.mxu0 0.0
  %155 = vmatpush1.msra.mxu0 0.0
  %156 = vmatprep.subr.mxu0 0.0
  %157 = vmatpush1.msra.mxu0 0.0
  %158 = vmatprep.subr.mxu0 0.0
  %159 = vmatpush1.msra.mxu0 0.0
  %160 = vmatprep.subr.mxu0 0.0
  %161 = vmatpush1.msra.mxu0 0.0
  %162 = vmatprep.subr.mxu0 0.0
  %163 = vmatpush1.msra.mxu0 0.0
  %164 = vmatprep.subr.mxu0 0.0
  %165 = vmatpush1.msra.mxu0 0.0
  %166 = vmatprep.subr.mxu0 0.0
  %167 = vmatpush1.msra.mxu0 0.0
  %168 = vmatprep.subr.mxu0 0.0
  %169 = vmatpush1.msra.mxu0 0.0
  %170 = vmatprep.subr.mxu0 0.0
  %171 = vmatpush1.msra.mxu0 0.0
  %172 = vmatprep.subr.mxu0 0.0
  %173 = vmatpush1.msra.mxu0 0.0
  %174 = vmatprep.subr.mxu0 0.0
  %175 = vmatpush1.msra.mxu0 0.0
  %176 = vmatprep.mubr.f32.mxu0 0.0
  %177 = vmatmul.mubr.f32.gmra.mrb[0].mxu0 %v101
  %v178 = vpop.f32.mrb[0].mxu0
  %v179 = vadd.f32 0.0, %v178
  %v180 = vpop.f32.mrb[0].mxu0
  %181 = vmatprep.mubr.f32.mxu0 0.0
  %182 = vmatmul.mubr.f32.gmra.mrb[0].mxu0 %v104
  %v183 = vpop.f32.mrb[0].mxu0
  %v184 = vadd.f32 0.0, %v183
  %v185 = vpop.f32.mrb[0].mxu0
  %186 = vmatprep.mubr.f32.mxu0 0.0
  %187 = vmatmul.mubr.f32.gmra.mrb[0].mxu0 %v107
  %v188 = vpop.f32.mrb[0].mxu0
  %v189 = vadd.f32 0.0, %v188
  %v190 = vpop.f32.mrb[0].mxu0
  %191 = vmatprep.mubr.f32.mxu0 0.0
  %192 = vmatmul.mubr.f32.gmra.mrb[0].mxu0 %v110
  %v193 = vpop.f32.mrb[0].mxu0
  %v194 = vadd.f32 0.0, %v193
  %v195 = vpop.f32.mrb[0].mxu0
  %196 = vdwg.mxu0
  %v197 = vld [vmem:[#allocation2] sm:$0xff]
  %v198 = vld [vmem:[#allocation2 + $0x8] sm:$0xff]
  %v199 = vld [vmem:[#allocation2 + $0x10] sm:$0xff]
  %v200 = vld [vmem:[#allocation2 + $0x18] sm:$0xff]
  %v201 = vld [vmem:[#allocation2 + $0x20] sm:$0x3]
  %v202 = vld [vmem:[#allocation2 + $0x2] sm:$0xff]
  %v203 = vld [vmem:[#allocation2 + $0xa] sm:$0xff]
  %v204 = vld [vmem:[#allocation2 + $0x12] sm:$0xff]
  %v205 = vld [vmem:[#allocation2 + $0x1a] sm:$0xff]
  %v206 = vld [vmem:[#allocation2 + $0x22] sm:$0x3]
  %v208 = vsel %vm69, %v202, 0
  %v211 = vsel %vm69, %v203, 0
  %v214 = vsel %vm69, %v204, 0
  %v217 = vsel %vm69, %v205, 0
  %v220 = vsel %vm69, %v206, 0
  %222 = vmatprep.subr.mxu0 0.0
  %223 = vmatpush1.msra.mxu0 %v92
  %224 = vmatprep.subr.mxu0 0.0
  %225 = vmatpush1.msra.mxu0 %v93
  %226 = vmatprep.subr.mxu0 0.0
  %227 = vmatpush1.msra.mxu0 %v94
  %228 = vmatprep.subr.mxu0 0.0
  %229 = vmatpush1.msra.mxu0 %v95
  %230 = vmatprep.subr.mxu0 0.0
  %231 = vmatpush1.msra.mxu0 %v96
  %232 = vmatprep.subr.mxu0 0.0
  %233 = vmatpush1.msra.mxu0 %v97
  %234 = vmatprep.subr.mxu0 0.0
  %235 = vmatpush1.msra.mxu0 %v98
  %236 = vmatprep.subr.mxu0 0.0
  %237 = vmatpush1.msra.mxu0 %v99
  %238 = vmatprep.subr.mxu0 0.0
  %239 = vmatpush1.msra.mxu0 0.0
  %240 = vmatprep.subr.mxu0 0.0
  %241 = vmatpush1.msra.mxu0 0.0
  %242 = vmatprep.subr.mxu0 0.0
  %243 = vmatpush1.msra.mxu0 0.0
  %244 = vmatprep.subr.mxu0 0.0
  %245 = vmatpush1.msra.mxu0 0.0
  %246 = vmatprep.subr.mxu0 0.0
  %247 = vmatpush1.msra.mxu0 0.0
  %248 = vmatprep.subr.mxu0 0.0
  %249 = vmatpush1.msra.mxu0 0.0
  %250 = vmatprep.subr.mxu0 0.0
  %251 = vmatpush1.msra.mxu0 0.0
  %252 = vmatprep.subr.mxu0 0.0
  %253 = vmatpush1.msra.mxu0 0.0
  %254 = vmatprep.subr.mxu0 0.0
  %255 = vmatpush1.msra.mxu0 0.0
  %256 = vmatprep.subr.mxu0 0.0
  %257 = vmatpush1.msra.mxu0 0.0
  %258 = vmatprep.subr.mxu0 0.0
  %259 = vmatpush1.msra.mxu0 0.0
  %260 = vmatprep.subr.mxu0 0.0
  %261 = vmatpush1.msra.mxu0 0.0
  %262 = vmatprep.subr.mxu0 0.0
  %263 = vmatpush1.msra.mxu0 0.0
  %264 = vmatprep.subr.mxu0 0.0
  %265 = vmatpush1.msra.mxu0 0.0
  %266 = vmatprep.subr.mxu0 0.0
  %267 = vmatpush1.msra.mxu0 0.0
  %268 = vmatprep.subr.mxu0 0.0
  %269 = vmatpush1.msra.mxu0 0.0
  %270 = vmatprep.subr.mxu0 0.0
  %271 = vmatpush1.msra.mxu0 0.0
  %272 = vmatprep.subr.mxu0 0.0
  %273 = vmatpush1.msra.mxu0 0.0
  %274 = vmatprep.subr.mxu0 0.0
  %275 = vmatpush1.msra.mxu0 0.0
  %276 = vmatprep.subr.mxu0 0.0
  %277 = vmatpush1.msra.mxu0 0.0
  %278 = vmatprep.subr.mxu0 0.0
  %279 = vmatpush1.msra.mxu0 0.0
  %280 = vmatprep.subr.mxu0 0.0
  %281 = vmatpush1.msra.mxu0 0.0
  %282 = vmatprep.subr.mxu0 0.0
  %283 = vmatpush1.msra.mxu0 0.0
  %284 = vmatprep.subr.mxu0 0.0
  %285 = vmatpush1.msra.mxu0 0.0
  %286 = vmatprep.mubr.f32.mxu0 0.0
  %287 = vmatmul.mubr.f32.gmra.mrb[0].mxu0 %v208
  %v288 = vpop.f32.mrb[0].mxu0
  %v289 = vadd.f32 0.0, %v288
  %v290 = vpop.f32.mrb[0].mxu0
  %291 = vmatprep.mubr.f32.mxu0 0.0
  %292 = vmatmul.mubr.f32.gmra.mrb[0].mxu0 %v211
  %v293 = vpop.f32.mrb[0].mxu0
  %v294 = vadd.f32 0.0, %v293
  %v295 = vpop.f32.mrb[0].mxu0
  %296 = vmatprep.mubr.f32.mxu0 0.0
  %297 = vmatmul.mubr.f32.gmra.mrb[0].mxu0 %v214
  %v298 = vpop.f32.mrb[0].mxu0
  %v299 = vadd.f32 0.0, %v298
  %v300 = vpop.f32.mrb[0].mxu0
  %301 = vmatprep.mubr.f32.mxu0 0.0
  %302 = vmatmul.mubr.f32.gmra.mrb[0].mxu0 %v217
  %v303 = vpop.f32.mrb[0].mxu0
  %v304 = vadd.f32 0.0, %v303
  %v305 = vpop.f32.mrb[0].mxu0
  %306 = vmatprep.mubr.f32.mxu0 0.0
  %307 = vmatmul.mubr.f32.gmra.mrb[0].mxu0 %v220
  %v308 = vpop.f32.mrb[0].mxu0
  %v309 = vadd.f32 0.0, %v308
  %v310 = vpop.f32.mrb[0].mxu0
  %311 = vdwg.mxu0
  %v313 = vsel %vm69, %v197, 0
  %v316 = vsel %vm69, %v198, 0
  %v319 = vsel %vm69, %v199, 0
  %v322 = vsel %vm69, %v200, 0
  %v325 = vsel %vm69, %v201, 0
  %327 = vmatprep.subr.mxu0 0.0
  %328 = vmatpush1.msra.mxu0 %v74
  %329 = vmatprep.subr.mxu0 0.0
  %330 = vmatpush1.msra.mxu0 %v75
  %331 = vmatprep.subr.mxu0 0.0
  %332 = vmatpush1.msra.mxu0 %v76
  %333 = vmatprep.subr.mxu0 0.0
  %334 = vmatpush1.msra.mxu0 %v77
  %335 = vmatprep.subr.mxu0 0.0
  %336 = vmatpush1.msra.mxu0 %v78
  %337 = vmatprep.subr.mxu0 0.0
  %338 = vmatpush1.msra.mxu0 %v79
  %339 = vmatprep.subr.mxu0 0.0
  %340 = vmatpush1.msra.mxu0 %v80
  %341 = vmatprep.subr.mxu0 0.0
  %342 = vmatpush1.msra.mxu0 %v81
  %343 = vmatprep.subr.mxu0 0.0
  %344 = vmatpush1.msra.mxu0 0.0
  %345 = vmatprep.subr.mxu0 0.0
  %346 = vmatpush1.msra.mxu0 0.0
  %347 = vmatprep.subr.mxu0 0.0
  %348 = vmatpush1.msra.mxu0 0.0
  %349 = vmatprep.subr.mxu0 0.0
  %350 = vmatpush1.msra.mxu0 0.0
  %351 = vmatprep.subr.mxu0 0.0
  %352 = vmatpush1.msra.mxu0 0.0
  %353 = vmatprep.subr.mxu0 0.0
  %354 = vmatpush1.msra.mxu0 0.0
  %355 = vmatprep.subr.mxu0 0.0
  %356 = vmatpush1.msra.mxu0 0.0
  %357 = vmatprep.subr.mxu0 0.0
  %358 = vmatpush1.msra.mxu0 0.0
  %359 = vmatprep.subr.mxu0 0.0
  %360 = vmatpush1.msra.mxu0 0.0
  %361 = vmatprep.subr.mxu0 0.0
  %362 = vmatpush1.msra.mxu0 0.0
  %363 = vmatprep.subr.mxu0 0.0
  %364 = vmatpush1.msra.mxu0 0.0
  %365 = vmatprep.subr.mxu0 0.0
  %366 = vmatpush1.msra.mxu0 0.0
  %367 = vmatprep.subr.mxu0 0.0
  %368 = vmatpush1.msra.mxu0 0.0
  %369 = vmatprep.subr.mxu0 0.0
  %370 = vmatpush1.msra.mxu0 0.0
  %371 = vmatprep.subr.mxu0 0.0
  %372 = vmatpush1.msra.mxu0 0.0
  %373 = vmatprep.subr.mxu0 0.0
  %374 = vmatpush1.msra.mxu0 0.0
  %375 = vmatprep.subr.mxu0 0.0
  %376 = vmatpush1.msra.mxu0 0.0
  %377 = vmatprep.subr.mxu0 0.0
  %378 = vmatpush1.msra.mxu0 0.0
  %379 = vmatprep.subr.mxu0 0.0
  %380 = vmatpush1.msra.mxu0 0.0
  %381 = vmatprep.subr.mxu0 0.0
  %382 = vmatpush1.msra.mxu0 0.0
  %383 = vmatprep.subr.mxu0 0.0
  %384 = vmatpush1.msra.mxu0 0.0
  %385 = vmatprep.subr.mxu0 0.0
  %386 = vmatpush1.msra.mxu0 0.0
  %387 = vmatprep.subr.mxu0 0.0
  %388 = vmatpush1.msra.mxu0 0.0
  %389 = vmatprep.subr.mxu0 0.0
  %390 = vmatpush1.msra.mxu0 0.0
  %391 = vmatprep.mubr.f32.mxu0 0.0
  %392 = vmatmul.mubr.f32.gmra.mrb[0].mxu0 %v313
  %v393 = vpop.f32.mrb[0].mxu0
  %v394 = vadd.f32 %v289, %v393
  %v395 = vpop.f32.mrb[0].mxu0
  %396 = vmatprep.mubr.f32.mxu0 0.0
  %397 = vmatmul.mubr.f32.gmra.mrb[0].mxu0 %v316
  %v398 = vpop.f32.mrb[0].mxu0
  %v399 = vadd.f32 %v294, %v398
  %v400 = vpop.f32.mrb[0].mxu0
  %401 = vmatprep.mubr.f32.mxu0 0.0
  %402 = vmatmul.mubr.f32.gmra.mrb[0].mxu0 %v319
  %v403 = vpop.f32.mrb[0].mxu0
  %v404 = vadd.f32 %v299, %v403
  %v405 = vpop.f32.mrb[0].mxu0
  %406 = vmatprep.mubr.f32.mxu0 0.0
  %407 = vmatmul.mubr.f32.gmra.mrb[0].mxu0 %v322
  %v408 = vpop.f32.mrb[0].mxu0
  %v409 = vadd.f32 %v304, %v408
  %v410 = vpop.f32.mrb[0].mxu0
  %411 = vmatprep.mubr.f32.mxu0 0.0
  %412 = vmatmul.mubr.f32.gmra.mrb[0].mxu0 %v325
  %v413 = vpop.f32.mrb[0].mxu0
  %v414 = vadd.f32 %v309, %v413
  %v415 = vpop.f32.mrb[0].mxu0
  %416 = vdwg.mxu0
  %v417 = vld [vmem:[%s5] sm:$0xff]
  %v418 = vld [vmem:[%s5 + $0x8] sm:$0xff]
  %v419 = vld [vmem:[%s5 + $0x10] sm:$0xff]
  %v420 = vld [vmem:[%s5 + $0x18] sm:$0xff]
  %v421 = vld [vmem:[%s5 + $0x20] sm:$0xff]
  %v422 = vld [vmem:[%s5 + $0x28] sm:$0xff]
  %v423 = vld [vmem:[%s5 + $0x30] sm:$0xff]
  %v424 = vld [vmem:[%s5 + $0x38] sm:$0xff]
  %425 = vmatprep.subr.mxu0 0.0
  %426 = vmatpush1.msra.mxu0 %v417
  %427 = vmatprep.subr.mxu0 0.0
  %428 = vmatpush1.msra.mxu0 %v418
  %429 = vmatprep.subr.mxu0 0.0
  %430 = vmatpush1.msra.mxu0 %v419
  %431 = vmatprep.subr.mxu0 0.0
  %432 = vmatpush1.msra.mxu0 %v420
  %433 = vmatprep.subr.mxu0 0.0
  %434 = vmatpush1.msra.mxu0 %v421
  %435 = vmatprep.subr.mxu0 0.0
  %436 = vmatpush1.msra.mxu0 %v422
  %437 = vmatprep.subr.mxu0 0.0
  %438 = vmatpush1.msra.mxu0 %v423
  %439 = vmatprep.subr.mxu0 0.0
  %440 = vmatpush1.msra.mxu0 %v424
  %441 = vmatprep.subr.mxu0 0.0
  %442 = vmatpush1.msra.mxu0 0.0
  %443 = vmatprep.subr.mxu0 0.0
  %444 = vmatpush1.msra.mxu0 0.0
  %445 = vmatprep.subr.mxu0 0.0
  %446 = vmatpush1.msra.mxu0 0.0
  %447 = vmatprep.subr.mxu0 0.0
  %448 = vmatpush1.msra.mxu0 0.0
  %449 = vmatprep.subr.mxu0 0.0
  %450 = vmatpush1.msra.mxu0 0.0
  %451 = vmatprep.subr.mxu0 0.0
  %452 = vmatpush1.msra.mxu0 0.0
  %453 = vmatprep.subr.mxu0 0.0
  %454 = vmatpush1.msra.mxu0 0.0
  %455 = vmatprep.subr.mxu0 0.0
  %456 = vmatpush1.msra.mxu0 0.0
  %457 = vmatprep.subr.mxu0 0.0
  %458 = vmatpush1.msra.mxu0 0.0
  %459 = vmatprep.subr.mxu0 0.0
  %460 = vmatpush1.msra.mxu0 0.0
  %461 = vmatprep.subr.mxu0 0.0
  %462 = vmatpush1.msra.mxu0 0.0
  %463 = vmatprep.subr.mxu0 0.0
  %464 = vmatpush1.msra.mxu0 0.0
  %465 = vmatprep.subr.mxu0 0.0
  %466 = vmatpush1.msra.mxu0 0.0
  %467 = vmatprep.subr.mxu0 0.0
  %468 = vmatpush1.msra.mxu0 0.0
  %469 = vmatprep.subr.mxu0 0.0
  %470 = vmatpush1.msra.mxu0 0.0
  %471 = vmatprep.subr.mxu0 0.0
  %472 = vmatpush1.msra.mxu0 0.0
  %473 = vmatprep.subr.mxu0 0.0
  %474 = vmatpush1.msra.mxu0 0.0
  %475 = vmatprep.subr.mxu0 0.0
  %476 = vmatpush1.msra.mxu0 0.0
  %477 = vmatprep.subr.mxu0 0.0
  %478 = vmatpush1.msra.mxu0 0.0
  %479 = vmatprep.subr.mxu0 0.0
  %480 = vmatpush1.msra.mxu0 0.0
  %481 = vmatprep.subr.mxu0 0.0
  %482 = vmatpush1.msra.mxu0 0.0
  %483 = vmatprep.subr.mxu0 0.0
  %484 = vmatpush1.msra.mxu0 0.0
  %485 = vmatprep.subr.mxu0 0.0
  %486 = vmatpush1.msra.mxu0 0.0
  %487 = vmatprep.subr.mxu0 0.0
  %488 = vmatpush1.msra.mxu0 0.0
  %489 = vmatprep.mubr.f32.mxu0 0.0
  %490 = vmatmul.mubr.f32.gmra.mrb[0].mxu0 %v101
  %v491 = vpop.f32.mrb[0].mxu0
  %v492 = vadd.f32 0.0, %v491
  %v493 = vpop.f32.mrb[0].mxu0
  %494 = vmatprep.mubr.f32.mxu0 0.0
  %495 = vmatmul.mubr.f32.gmra.mrb[0].mxu0 %v104
  %v496 = vpop.f32.mrb[0].mxu0
  %v497 = vadd.f32 0.0, %v496
  %v498 = vpop.f32.mrb[0].mxu0
  %499 = vmatprep.mubr.f32.mxu0 0.0
  %500 = vmatmul.mubr.f32.gmra.mrb[0].mxu0 %v107
  %v501 = vpop.f32.mrb[0].mxu0
  %v502 = vadd.f32 0.0, %v501
  %v503 = vpop.f32.mrb[0].mxu0
  %504 = vmatprep.mubr.f32.mxu0 0.0
  %505 = vmatmul.mubr.f32.gmra.mrb[0].mxu0 %v110
  %v506 = vpop.f32.mrb[0].mxu0
  %v507 = vadd.f32 0.0, %v506
  %v508 = vpop.f32.mrb[0].mxu0
  %509 = vdwg.mxu0
  %510 = vst [vmem:[%s9] sm:$0xff] %v492
  %511 = vst [vmem:[%s9 + $0x8] sm:$0xff] %v497
  %512 = vst [vmem:[%s9 + $0x10] sm:$0xff] %v502
  %513 = vst [vmem:[%s9 + $0x18] sm:$0xff] %v507
  %v514 = vadd.f32 %v179, %v394
  %v515 = vadd.f32 %v184, %v399
  %v516 = vadd.f32 %v514, %v515
  %v517 = vrot.slane %v516, 4
  %v518 = vadd.f32 %v516, %v517
  %v519 = vrot.slane %v518, 2
  %v520 = vadd.f32 %v518, %v519
  %v521 = vrot.slane %v520, 1
  %v522 = vadd.f32 %v520, %v521
  %v523 = vadd.f32 %v522, 0.0
  %v524 = vmul.f32 %v514, %v514
  %v525 = vmul.f32 %v515, %v515
  %v526 = vadd.f32 %v524, %v525
  %v527 = vrot.slane %v526, 4
  %v528 = vadd.f32 %v526, %v527
  %v529 = vrot.slane %v528, 2
  %v530 = vadd.f32 %v528, %v529
  %v531 = vrot.slane %v530, 1
  %v532 = vadd.f32 %v530, %v531
  %v533 = vadd.f32 %v532, 0.0
  %534 = vst [vmem:[%s6] sm:$0xff] %v514
  %535 = vst [vmem:[%s6 + $0x8] sm:$0xff] %v515
  %vm539 = vcmask 1045504
  %v540 = vrot.slane %v404, 2
  %v541 = vrot.slane %v409, 2
  %v542 = vsel %vm539, %v540, %v541
  %v543 = vrot.slane %v414, 2
  %v544 = vsel %vm539, %v541, %v543
  %v547 = vadd.f32 %v189, %v542
  %v548 = vadd.f32 %v194, %v544
  %v549 = vadd.f32 %v547, %v548
  %v550 = vrot.slane %v549, 4
  %v551 = vadd.f32 %v549, %v550
  %v552 = vrot.slane %v551, 2
  %v553 = vadd.f32 %v551, %v552
  %v554 = vrot.slane %v553, 1
  %v555 = vadd.f32 %v553, %v554
  %v556 = vadd.f32 %v523, %v555
  %v557 = vmul.f32 %v547, %v547
  %v558 = vmul.f32 %v548, %v548
  %v559 = vadd.f32 %v557, %v558
  %v560 = vrot.slane %v559, 4
  %v561 = vadd.f32 %v559, %v560
  %v562 = vrot.slane %v561, 2
  %v563 = vadd.f32 %v561, %v562
  %v564 = vrot.slane %v563, 1
  %v565 = vadd.f32 %v563, %v564
  %v566 = vadd.f32 %v533, %v565
  %567 = vst [vmem:[%s6 + $0x10] sm:$0xff] %v547
  %568 = vst [vmem:[%s6 + $0x18] sm:$0xff] %v548
  %v569 = vld [vmem:[%s7] sm:$0x1]
  %v570 = vld [vmem:[%s4] sm:$0xff]
  %v571 = vld [vmem:[%s4 + $0x8] sm:$0xff]
  %v572 = vld [vmem:[%s4 + $0x10] sm:$0xff]
  %v573 = vld [vmem:[%s4 + $0x18] sm:$0xff]
  %v574 = vld [vmem:[%s4 + $0x20] sm:$0xff]
  %v575 = vld [vmem:[%s4 + $0x28] sm:$0xff]
  %v576 = vld [vmem:[%s4 + $0x30] sm:$0xff]
  %v577 = vld [vmem:[%s4 + $0x38] sm:$0xff]
  %v578 = vld [vmem:[%s4 + $0x40] sm:$0xff]
  %v579 = vld [vmem:[%s4 + $0x48] sm:$0xff]
  %v580 = vld [vmem:[%s4 + $0x50] sm:$0xff]
  %v581 = vld [vmem:[%s4 + $0x58] sm:$0xff]
  %v582 = vld [vmem:[%s4 + $0x60] sm:$0xff]
  %v583 = vld [vmem:[%s4 + $0x68] sm:$0xff]
  %v584 = vld [vmem:[%s4 + $0x70] sm:$0xff]
  %v585 = vld [vmem:[%s4 + $0x78] sm:$0xff]
  %586 = vmatprep.subr.mxu0 0.0
  %587 = vmatpush1.msra.mxu0 %v570
  %588 = vmatprep.subr.mxu0 0.0
  %589 = vmatpush1.msra.mxu0 %v571
  %590 = vmatprep.subr.mxu0 0.0
  %591 = vmatpush1.msra.mxu0 %v572
  %592 = vmatprep.subr.mxu0 0.0
  %593 = vmatpush1.msra.mxu0 %v573
  %594 = vmatprep.subr.mxu0 0.0
  %595 = vmatpush1.msra.mxu0 %v574
  %596 = vmatprep.subr.mxu0 0.0
  %597 = vmatpush1.msra.mxu0 %v575
  %598 = vmatprep.subr.mxu0 0.0
  %599 = vmatpush1.msra.mxu0 %v576
  %600 = vmatprep.subr.mxu0 0.0
  %601 = vmatpush1.msra.mxu0 %v577
  %602 = vmatprep.subr.mxu0 0.0
  %603 = vmatpush1.msra.mxu0 %v578
  %604 = vmatprep.subr.mxu0 0.0
  %605 = vmatpush1.msra.mxu0 %v579
  %606 = vmatprep.subr.mxu0 0.0
  %607 = vmatpush1.msra.mxu0 %v580
  %608 = vmatprep.subr.mxu0 0.0
  %609 = vmatpush1.msra.mxu0 %v581
  %610 = vmatprep.subr.mxu0 0.0
  %611 = vmatpush1.msra.mxu0 %v582
  %612 = vmatprep.subr.mxu0 0.0
  %613 = vmatpush1.msra.mxu0 %v583
  %614 = vmatprep.subr.mxu0 0.0
  %615 = vmatpush1.msra.mxu0 %v584
  %616 = vmatprep.subr.mxu0 0.0
  %617 = vmatpush1.msra.mxu0 %v585
  %618 = vmatprep.subr.mxu0 0.0
  %619 = vmatpush1.msra.mxu0 0.0
  %620 = vmatprep.subr.mxu0 0.0
  %621 = vmatpush1.msra.mxu0 0.0
  %622 = vmatprep.subr.mxu0 0.0
  %623 = vmatpush1.msra.mxu0 0.0
  %624 = vmatprep.subr.mxu0 0.0
  %625 = vmatpush1.msra.mxu0 0.0
  %626 = vmatprep.subr.mxu0 0.0
  %627 = vmatpush1.msra.mxu0 0.0
  %628 = vmatprep.subr.mxu0 0.0
  %629 = vmatpush1.msra.mxu0 0.0
  %630 = vmatprep.subr.mxu0 0.0
  %631 = vmatpush1.msra.mxu0 0.0
  %632 = vmatprep.subr.mxu0 0.0
  %633 = vmatpush1.msra.mxu0 0.0
  %634 = vmatprep.subr.mxu0 0.0
  %635 = vmatpush1.msra.mxu0 0.0
  %636 = vmatprep.subr.mxu0 0.0
  %637 = vmatpush1.msra.mxu0 0.0
  %638 = vmatprep.subr.mxu0 0.0
  %639 = vmatpush1.msra.mxu0 0.0
  %640 = vmatprep.subr.mxu0 0.0
  %641 = vmatpush1.msra.mxu0 0.0
  %642 = vmatprep.subr.mxu0 0.0
  %643 = vmatpush1.msra.mxu0 0.0
  %644 = vmatprep.subr.mxu0 0.0
  %645 = vmatpush1.msra.mxu0 0.0
  %646 = vmatprep.subr.mxu0 0.0
  %647 = vmatpush1.msra.mxu0 0.0
  %648 = vmatprep.subr.mxu0 0.0
  %649 = vmatpush1.msra.mxu0 0.0
  %650 = vmatprep.mubr.f32.mxu0 0.0
  %651 = vmatmul.mubr.f32.gmra.mrb[0].mxu0 %v556
  %v652 = vpop.f32.mrb[0].mxu0
  %v653 = vadd.f32 0.0, %v652
  %v654 = vpop.f32.mrb[0].mxu0
  %655 = vdwg.mxu0
  %v656 = vadd.f32 %v569, %v653
  %vm657 = vcmask 57344
  %658 = vst.msk [vmem:[%s7] sm:$0x1] %vm657, %v656
  %v659 = vld [vmem:[%s8] sm:$0x1]
  %v660 = vld [vmem:[%s4] sm:$0xff]
  %v661 = vld [vmem:[%s4 + $0x8] sm:$0xff]
  %v662 = vld [vmem:[%s4 + $0x10] sm:$0xff]
  %v663 = vld [vmem:[%s4 + $0x18] sm:$0xff]
  %v664 = vld [vmem:[%s4 + $0x20] sm:$0xff]
  %v665 = vld [vmem:[%s4 + $0x28] sm:$0xff]
  %v666 = vld [vmem:[%s4 + $0x30] sm:$0xff]
  %v667 = vld [vmem:[%s4 + $0x38] sm:$0xff]
  %v668 = vld [vmem:[%s4 + $0x40] sm:$0xff]
  %v669 = vld [vmem:[%s4 + $0x48] sm:$0xff]
  %v670 = vld [vmem:[%s4 + $0x50] sm:$0xff]
  %v671 = vld [vmem:[%s4 + $0x58] sm:$0xff]
  %v672 = vld [vmem:[%s4 + $0x60] sm:$0xff]
  %v673 = vld [vmem:[%s4 + $0x68] sm:$0xff]
  %v674 = vld [vmem:[%s4 + $0x70] sm:$0xff]
  %v675 = vld [vmem:[%s4 + $0x78] sm:$0xff]
  %676 = vmatprep.subr.mxu0 0.0
  %677 = vmatpush1.msra.mxu0 %v660
  %678 = vmatprep.subr.mxu0 0.0
  %679 = vmatpush1.msra.mxu0 %v661
  %680 = vmatprep.subr.mxu0 0.0
  %681 = vmatpush1.msra.mxu0 %v662
  %682 = vmatprep.subr.mxu0 0.0
  %683 = vmatpush1.msra.mxu0 %v663
  %684 = vmatprep.subr.mxu0 0.0
  %685 = vmatpush1.msra.mxu0 %v664
  %686 = vmatprep.subr.mxu0 0.0
  %687 = vmatpush1.msra.mxu0 %v665
  %688 = vmatprep.subr.mxu0 0.0
  %689 = vmatpush1.msra.mxu0 %v666
  %690 = vmatprep.subr.mxu0 0.0
  %691 = vmatpush1.msra.mxu0 %v667
  %692 = vmatprep.subr.mxu0 0.0
  %693 = vmatpush1.msra.mxu0 %v668
  %694 = vmatprep.subr.mxu0 0.0
  %695 = vmatpush1.msra.mxu0 %v669
  %696 = vmatprep.subr.mxu0 0.0
  %697 = vmatpush1.msra.mxu0 %v670
  %698 = vmatprep.subr.mxu0 0.0
  %699 = vmatpush1.msra.mxu0 %v671
  %700 = vmatprep.subr.mxu0 0.0
  %701 = vmatpush1.msra.mxu0 %v672
  %702 = vmatprep.subr.mxu0 0.0
  %703 = vmatpush1.msra.mxu0 %v673
  %704 = vmatprep.subr.mxu0 0.0
  %705 = vmatpush1.msra.mxu0 %v674
  %706 = vmatprep.subr.mxu0 0.0
  %707 = vmatpush1.msra.mxu0 %v675
  %708 = vmatprep.subr.mxu0 0.0
  %709 = vmatpush1.msra.mxu0 0.0
  %710 = vmatprep.subr.mxu0 0.0
  %711 = vmatpush1.msra.mxu0 0.0
  %712 = vmatprep.subr.mxu0 0.0
  %713 = vmatpush1.msra.mxu0 0.0
  %714 = vmatprep.subr.mxu0 0.0
  %715 = vmatpush1.msra.mxu0 0.0
  %716 = vmatprep.subr.mxu0 0.0
  %717 = vmatpush1.msra.mxu0 0.0
  %718 = vmatprep.subr.mxu0 0.0
  %719 = vmatpush1.msra.mxu0 0.0
  %720 = vmatprep.subr.mxu0 0.0
  %721 = vmatpush1.msra.mxu0 0.0
  %722 = vmatprep.subr.mxu0 0.0
  %723 = vmatpush1.msra.mxu0 0.0
  %724 = vmatprep.subr.mxu0 0.0
  %725 = vmatpush1.msra.mxu0 0.0
  %726 = vmatprep.subr.mxu0 0.0
  %727 = vmatpush1.msra.mxu0 0.0
  %728 = vmatprep.subr.mxu0 0.0
  %729 = vmatpush1.msra.mxu0 0.0
  %730 = vmatprep.subr.mxu0 0.0
  %731 = vmatpush1.msra.mxu0 0.0
  %732 = vmatprep.subr.mxu0 0.0
  %733 = vmatpush1.msra.mxu0 0.0
  %734 = vmatprep.subr.mxu0 0.0
  %735 = vmatpush1.msra.mxu0 0.0
  %736 = vmatprep.subr.mxu0 0.0
  %737 = vmatpush1.msra.mxu0 0.0
  %738 = vmatprep.subr.mxu0 0.0
  %739 = vmatpush1.msra.mxu0 0.0
  %740 = vmatprep.mubr.f32.mxu0 0.0
  %741 = vmatmul.mubr.f32.gmra.mrb[0].mxu0 %v566
  %v742 = vpop.f32.mrb[0].mxu0
  %v743 = vadd.f32 0.0, %v742
  %v744 = vpop.f32.mrb[0].mxu0
  %745 = vdwg.mxu0
  %v746 = vadd.f32 %v659, %v743
  %747 = vst.msk [vmem:[%s8] sm:$0x1] %vm657, %v746
  // Predicated region
  $region30: #{preact_block_forward.4} parent=0 // pred_check
    _
  $region31: #{preact_block_forward.4} parent=0 // pred_check_branch
    %749 = sbr.rel (0) target = $region33
  $region32: #{preact_block_forward.4} parent=0 // pred_region
    _
  $region33: #{preact_block_forward.4} parent=0 // pred_fallthru
    _
  // Predicated region
  $region34: #{preact_block_forward.4} parent=0 // pred_check
    _
  $region35: #{preact_block_forward.4} parent=0 // pred_check_branch
    %751 = sbr.rel (0) target = $region37
  $region36: #{preact_block_forward.4} parent=0 // pred_region
    _
  $region37: #{preact_block_forward.4} parent=0 // pred_fallthru
    _
  // Predicated region
  $region38: #{preact_block_forward.4} parent=0 // pred_check
    _
  $region39: #{preact_block_forward.4} parent=0 // pred_check_branch
    %753 = sbr.rel (0) target = $region41
  $region40: #{preact_block_forward.4} parent=0 // pred_region
    _
  $region41: #{preact_block_forward.4} parent=0 // pred_fallthru
    _
  // Predicated region
  $region42: #{preact_block_forward.4} parent=0 // pred_check
    _
  $region43: #{preact_block_forward.4} parent=0 // pred_check_branch
    %755 = sbr.rel (0) target = $region45
  $region44: #{preact_block_forward.4} parent=0 // pred_region
    _
  $region45: #{preact_block_forward.4} parent=0 // pred_fallthru
    _
  // Predicated region
  $region46: #{preact_block_forward.4} parent=0 // pred_check
    _
  $region47: #{preact_block_forward.4} parent=0 // pred_check_branch
    %757 = sbr.rel (0) target = $region49
  $region48: #{preact_block_forward.4} parent=0 // pred_region
    _
  $region49: #{preact_block_forward.4} parent=0 // pred_fallthru
    _
  // Predicated region
  $region50: #{preact_block_forward.4} parent=0 // pred_check
    _
  $region51: #{preact_block_forward.4} parent=0 // pred_check_branch
    %759 = sbr.rel (0) target = $region53
  $region52: #{preact_block_forward.4} parent=0 // pred_region
    _
  $region53: #{preact_block_forward.4} parent=0 // pred_fallthru
    _
  // Predicated region
  $region54: #{preact_block_forward.4} parent=0 // pred_check
    _
  $region55: #{preact_block_forward.4} parent=0 // pred_check_branch
    %761 = sbr.rel (0) target = $region57
  $region56: #{preact_block_forward.4} parent=0 // pred_region
    _
  $region57: #{preact_block_forward.4} parent=0 // pred_fallthru
    _
  // Predicated region
  $region58: #{preact_block_forward.4} parent=0 // pred_check
    _
  $region59: #{preact_block_forward.4} parent=0 // pred_check_branch
    %763 = sbr.rel (0) target = $region61
  $region60: #{preact_block_forward.4} parent=0 // pred_region
    _
  $region61: #{preact_block_forward.4} parent=0 // pred_fallthru
    _

</llo_original>
